<compile_context>
chip_gen: v7x
topology: tpu7x:2x2x1
jax: 0.10.0
libtpu: 0.0.40
codegen_flags: <defaults>
</compile_context>

<pallas_src>
import jax
import jax.numpy as jnp
from jax.experimental import pallas as pl
from jax.experimental.pallas import tpu as pltpu


# ----------------------------- fused Pallas kernel -------------------------

def fused_cbm_kernel(x_ref, wim_ref, bconv_ref, w1_ref, b1_ref, w2_ref, b2_ref,
                     out_ref):
    """Fused concept-bottleneck forward for one batch tile.

    x_ref:    (TB, H, W, Cin)     NHWC input tile (unpadded)
    wim_ref:  (9*Cin, Cout)       conv weight reshaped for the im2col matmul
    bconv_ref:(1, Cout)
    w1_ref:   (Cout, n_concepts)   b1_ref: (1, n_concepts)
    w2_ref:   (n_concepts, NCP)    b2_ref: (1, NCP)       (NCP = 128-padded classes)
    out_ref:  (1, TB, NCP)         lane-dense logits slab
    """
    TB, H, W, Cin = x_ref.shape
    Cout = bconv_ref.shape[-1]

    x = x_ref[...]

    # ---- zero halo for the 3x3 / pad=1 conv, built in-kernel (no wrapper pad).
    # Pad H first: H is an untiled (free) axis, so this concat is cheap.
    zh = jnp.zeros((TB, 1, W, Cin), x.dtype)
    xh = jnp.concatenate([zh, x, zh], axis=1)                      # (TB, H+2, W, Cin)

    # Only three W-axis (sublane) shifts; all other taps are free H-slices.
    zw = jnp.zeros((TB, H + 2, 1, Cin), x.dtype)
    x_left  = jnp.concatenate([zw, xh[:, :, :W - 1, :]], axis=2)   # reads x[.., w-1]
    x_mid   = xh                                                   # reads x[.., w  ]
    x_right = jnp.concatenate([xh[:, :, 1:, :], zw], axis=2)       # reads x[.., w+1]
    shifted = (x_left, x_mid, x_right)

    # ---- im2col built ONCE: tap (di,dj) = shifted[dj][:, di:di+H]  -> single MXU dot.
    # Order (di major, dj, Cin minor) matches w_conv.reshape(9*Cin, Cout).
    taps = [shifted[dj][:, di:di + H, :, :]
            for di in range(3) for dj in range(3)]                 # each (TB, H, W, Cin)
    patch = jnp.concatenate(taps, axis=-1).reshape(TB * H * W, 9 * Cin)

    conv = jnp.dot(patch.astype(wim_ref.dtype), wim_ref[...],
                   preferred_element_type=jnp.float32)             # (TB*H*W, Cout), f32 acc
    act = jnp.maximum(conv + bconv_ref[...], 0.0)                  # ReLU; never hits HBM

    # ---- global average pool fused in VMEM/vregs (cross-sublane reduce on XLU).
    pooled = jnp.sum(act.reshape(TB, H * W, Cout), axis=1) * (1.0 / (H * W))  # (TB, Cout)

    # ---- concept head + sigmoid (the use_sigmoid=True branch).
    z = jnp.dot(pooled, w1_ref[...],
                preferred_element_type=jnp.float32) + b1_ref[...]
    attr = 1.0 / (1.0 + jnp.exp(-z))                               # EUP exp; exact divide

    # ---- end model; output is already a lane-dense 128-wide slab.
    logits = jnp.dot(attr, w2_ref[...],
                     preferred_element_type=jnp.float32) + b2_ref[...]
    out_ref[...] = logits.reshape(out_ref.shape)


# ----------------------------- wrapper --------------------------------------

def full_mask_stage2_forward(x_nchw, params, *, batch_tile=8,
                             matmul_dtype=jnp.float32):
    """Forward pass of FullMaskStage2Model (use_sigmoid=True, return_attributes=False)."""
    w_conv, b_conv, w1, b1, w2, b2 = (
        params["w_conv"], params["b_conv"], params["w1"],
        params["b1"], params["w2"], params["b2"],
    )
    N, Cin, H, W = x_nchw.shape
    Cout = w_conv.shape[-1]
    n_concepts = w1.shape[-1]
    n_classes = w2.shape[-1]

    # Batch tiling: grid over ceil(N/TB) tiles, "parallel" -> megacore split on v7x.
    TB = max(1, min(batch_tile, N))
    G = -(-N // TB)
    Npad = G * TB

    # NCHW -> NHWC once in plain JAX (channels on the lane axis inside the kernel).
    x = jnp.transpose(x_nchw, (0, 2, 3, 1)).astype(jnp.float32)
    if Npad != N:
        x = jnp.pad(x, ((0, Npad - N), (0, 0), (0, 0), (0, 0)))

    # Conv weight reshaped for the single im2col matmul.
    # (pass matmul_dtype=jnp.bfloat16 on v6e/v7x; accumulation stays f32)
    w_im = w_conv.reshape(9 * Cin, Cout).astype(matmul_dtype)

    # Zero-pad end-model columns so the only HBM store is lane-dense (128-wide).
    NCP = ((n_classes + 127) // 128) * 128
    w2p = jnp.pad(w2.astype(jnp.float32), ((0, 0), (0, NCP - n_classes)))
    b2p = jnp.pad(b2.astype(jnp.float32), ((0, 0), (0, NCP - n_classes)))

    out = pl.pallas_call(
        fused_cbm_kernel,
        out_shape=jax.ShapeDtypeStruct((G, TB, NCP), jnp.float32),
        grid_spec=pltpu.PrefetchScalarGridSpec(
            num_scalar_prefetch=0,
            grid=(G,),
            in_specs=[
                pl.BlockSpec((TB, H, W, Cin), lambda i: (i, 0, 0, 0)),   # x tile
                pl.BlockSpec((9 * Cin, Cout), lambda i: (0, 0)),         # w_im2col
                pl.BlockSpec((1, Cout), lambda i: (0, 0)),               # b_conv
                pl.BlockSpec((Cout, n_concepts), lambda i: (0, 0)),      # w1
                pl.BlockSpec((1, n_concepts), lambda i: (0, 0)),         # b1
                pl.BlockSpec((n_concepts, NCP), lambda i: (0, 0)),       # w2 (padded)
                pl.BlockSpec((1, NCP), lambda i: (0, 0)),                # b2 (padded)
            ],
            out_specs=pl.BlockSpec((1, TB, NCP), lambda i: (i, 0, 0)),
        ),
        compiler_params=pltpu.CompilerParams(
            dimension_semantics=("parallel",),   # batch tiles are independent
        ),
    )(x, w_im, b_conv.astype(jnp.float32), w1.astype(jnp.float32),
      b1.astype(jnp.float32), w2p, b2p)

    return out.reshape(Npad, NCP)[:N, :n_classes]


# ----------------------------- reference (pure JAX) --------------------------

def reference_forward(x_nchw, params):
    w_conv, b_conv, w1, b1, w2, b2 = (
        params["w_conv"], params["b_conv"], params["w1"],
        params["b1"], params["w2"], params["b2"],
    )
    N, Cin, H, W = x_nchw.shape
    Cout = w_conv.shape[-1]
    x = jnp.transpose(x_nchw, (0, 2, 3, 1)).astype(jnp.float32)
    xp = jnp.pad(x, ((0, 0), (1, 1), (1, 1), (0, 0)))
    acc = jnp.zeros((N, H, W, Cout), jnp.float32)
    for di in range(3):
        for dj in range(3):
            acc = acc + jnp.einsum("nhwc,co->nhwo",
                                   xp[:, di:di + H, dj:dj + W, :], w_conv[di, dj])
    h = jnp.maximum(acc + b_conv[0], 0.0)
    pooled = jnp.mean(h, axis=(1, 2))
    attr = 1.0 / (1.0 + jnp.exp(-(pooled @ w1 + b1[0])))
    return attr @ w2 + b2[0]


# ----------------------------- main ------------------------------------------

if __name__ == "__main__":
    N, Cin, H, W = 2, 4, 16, 16
    Cmid, n_concepts, n_classes = 8, 16, 5

    key = jax.random.PRNGKey(0)
    k = jax.random.split(key, 7)
    params = {
        "w_conv": jax.random.normal(k[0], (3, 3, Cin, Cmid), jnp.float32) * 0.1,
        "b_conv": jax.random.normal(k[1], (1, Cmid), jnp.float32) * 0.1,
        "w1":     jax.random.normal(k[2], (Cmid, n_concepts), jnp.float32) * 0.1,
        "b1":     jax.random.normal(k[3], (1, n_concepts), jnp.float32) * 0.1,
        "w2":     jax.random.normal(k[4], (n_concepts, n_classes), jnp.float32) * 0.1,
        "b2":     jax.random.normal(k[5], (1, n_classes), jnp.float32) * 0.1,
    }
    x = jax.random.normal(k[6], (N, Cin, H, W), jnp.float32)

    # batch_tile=1 -> grid=(2,) so the parallel batch grid is actually exercised.
    out = jax.block_until_ready(full_mask_stage2_forward(x, params, batch_tile=1))
    ref = jax.block_until_ready(reference_forward(x, params))

    assert out.shape == (N, n_classes)
    assert jnp.allclose(out, ref, atol=1e-4, rtol=1e-4), "mismatch vs reference"
    print("KERNEL_OK")
</pallas_src>

<mosaic_0001>
module attributes {stable_mosaic.version = 11 : i64} {
  func.func @fused_cbm_kernel(%arg0: i32, %arg1: memref<1x16x16x4xf32, #tpu.memory_space<vmem>>, %arg2: memref<36x8xf32, #tpu.memory_space<vmem>>, %arg3: memref<1x8xf32, #tpu.memory_space<vmem>>, %arg4: memref<8x16xf32, #tpu.memory_space<vmem>>, %arg5: memref<1x16xf32, #tpu.memory_space<vmem>>, %arg6: memref<16x128xf32, #tpu.memory_space<vmem>>, %arg7: memref<1x128xf32, #tpu.memory_space<vmem>>, %arg8: memref<1x1x128xf32, #tpu.memory_space<vmem>>) attributes {dimension_semantics = [#tpu.dimension_semantics<parallel>], iteration_bounds = array<i64: 2>, scalar_prefetch = 0 : i64, scratch_operands = 0 : i64, tpu.core_type = #tpu.core_type<tc>, window_params = [{transform_indices = @transform_0, window_bounds = array<i64: 1, 16, 16, 4>}, {pipeline_mode = #tpu.pipeline_mode<synchronous>, transform_indices = @transform_1, window_bounds = array<i64: 36, 8>}, {pipeline_mode = #tpu.pipeline_mode<synchronous>, transform_indices = @transform_2, window_bounds = array<i64: 1, 8>}, {pipeline_mode = #tpu.pipeline_mode<synchronous>, transform_indices = @transform_3, window_bounds = array<i64: 8, 16>}, {pipeline_mode = #tpu.pipeline_mode<synchronous>, transform_indices = @transform_4, window_bounds = array<i64: 1, 16>}, {pipeline_mode = #tpu.pipeline_mode<synchronous>, transform_indices = @transform_5, window_bounds = array<i64: 16, 128>}, {pipeline_mode = #tpu.pipeline_mode<synchronous>, transform_indices = @transform_6, window_bounds = array<i64: 1, 128>}, {transform_indices = @transform_7, window_bounds = array<i64: 1, 1, 128>}]} {
    %c0 = arith.constant 0 : index
    %c0_0 = arith.constant 0 : index
    %c0_1 = arith.constant 0 : index
    %c0_2 = arith.constant 0 : index
    %0 = vector.load %arg1[%c0, %c0_0, %c0_1, %c0_2] : memref<1x16x16x4xf32, #tpu.memory_space<vmem>>, vector<1x16x16x4xf32>
    %cst = arith.constant 0.000000e+00 : f32
    %1 = vector.broadcast %cst : f32 to vector<1x1x16x4xf32>
    %2 = tpu.concatenate %1, %0, %1 in 1 : vector<1x1x16x4xf32>, vector<1x16x16x4xf32>, vector<1x1x16x4xf32> -> vector<1x18x16x4xf32>
    %cst_3 = arith.constant 0.000000e+00 : f32
    %3 = vector.broadcast %cst_3 : f32 to vector<1x18x1x4xf32>
    %4 = vector.extract_strided_slice %2 {offsets = [0, 0, 0, 0], sizes = [1, 18, 15, 4], strides = [1, 1, 1, 1]} : vector<1x18x16x4xf32> to vector<1x18x15x4xf32>
    %5 = tpu.concatenate %3, %4 in 2 : vector<1x18x1x4xf32>, vector<1x18x15x4xf32> -> vector<1x18x16x4xf32>
    %6 = vector.extract_strided_slice %2 {offsets = [0, 0, 1, 0], sizes = [1, 18, 15, 4], strides = [1, 1, 1, 1]} : vector<1x18x16x4xf32> to vector<1x18x15x4xf32>
    %7 = tpu.concatenate %6, %3 in 2 : vector<1x18x15x4xf32>, vector<1x18x1x4xf32> -> vector<1x18x16x4xf32>
    %8 = vector.extract_strided_slice %5 {offsets = [0, 0, 0, 0], sizes = [1, 16, 16, 4], strides = [1, 1, 1, 1]} : vector<1x18x16x4xf32> to vector<1x16x16x4xf32>
    %9 = vector.extract_strided_slice %2 {offsets = [0, 0, 0, 0], sizes = [1, 16, 16, 4], strides = [1, 1, 1, 1]} : vector<1x18x16x4xf32> to vector<1x16x16x4xf32>
    %10 = vector.extract_strided_slice %7 {offsets = [0, 0, 0, 0], sizes = [1, 16, 16, 4], strides = [1, 1, 1, 1]} : vector<1x18x16x4xf32> to vector<1x16x16x4xf32>
    %11 = vector.extract_strided_slice %5 {offsets = [0, 1, 0, 0], sizes = [1, 16, 16, 4], strides = [1, 1, 1, 1]} : vector<1x18x16x4xf32> to vector<1x16x16x4xf32>
    %12 = vector.extract_strided_slice %2 {offsets = [0, 1, 0, 0], sizes = [1, 16, 16, 4], strides = [1, 1, 1, 1]} : vector<1x18x16x4xf32> to vector<1x16x16x4xf32>
    %13 = vector.extract_strided_slice %7 {offsets = [0, 1, 0, 0], sizes = [1, 16, 16, 4], strides = [1, 1, 1, 1]} : vector<1x18x16x4xf32> to vector<1x16x16x4xf32>
    %14 = vector.extract_strided_slice %5 {offsets = [0, 2, 0, 0], sizes = [1, 16, 16, 4], strides = [1, 1, 1, 1]} : vector<1x18x16x4xf32> to vector<1x16x16x4xf32>
    %15 = vector.extract_strided_slice %2 {offsets = [0, 2, 0, 0], sizes = [1, 16, 16, 4], strides = [1, 1, 1, 1]} : vector<1x18x16x4xf32> to vector<1x16x16x4xf32>
    %16 = vector.extract_strided_slice %7 {offsets = [0, 2, 0, 0], sizes = [1, 16, 16, 4], strides = [1, 1, 1, 1]} : vector<1x18x16x4xf32> to vector<1x16x16x4xf32>
    %17 = tpu.concatenate %8, %9, %10, %11, %12, %13, %14, %15, %16 in 3 : vector<1x16x16x4xf32>, vector<1x16x16x4xf32>, vector<1x16x16x4xf32>, vector<1x16x16x4xf32>, vector<1x16x16x4xf32>, vector<1x16x16x4xf32>, vector<1x16x16x4xf32>, vector<1x16x16x4xf32>, vector<1x16x16x4xf32> -> vector<1x16x16x36xf32>
    %18 = vector.shape_cast %17 : vector<1x16x16x36xf32> to vector<256x36xf32>
    %c0_4 = arith.constant 0 : index
    %c0_5 = arith.constant 0 : index
    %19 = vector.load %arg2[%c0_4, %c0_5] : memref<36x8xf32, #tpu.memory_space<vmem>>, vector<36x8xf32>
    %cst_6 = arith.constant dense<0.000000e+00> : vector<256x8xf32>
    %20 = tpu.matmul %18, %19, %cst_6 {dimension_numbers = #tpu.dot_dimension_numbers<[1], [0], [0], [1], [0, 0, 1, 1], [], []>} : vector<256x36xf32>, vector<36x8xf32>, vector<256x8xf32> -> vector<256x8xf32>
    %c0_7 = arith.constant 0 : index
    %c0_8 = arith.constant 0 : index
    %21 = vector.load %arg3[%c0_7, %c0_8] : memref<1x8xf32, #tpu.memory_space<vmem>>, vector<1x8xf32>
    %22 = vector.broadcast %21 : vector<1x8xf32> to vector<256x8xf32>
    %23 = arith.addf %20, %22 : vector<256x8xf32>
    %cst_9 = arith.constant 0.000000e+00 : f32
    %24 = vector.broadcast %cst_9 : f32 to vector<256x8xf32>
    %25 = arith.maximumf %23, %24 : vector<256x8xf32>
    %26 = vector.shape_cast %25 : vector<256x8xf32> to vector<1x256x8xf32>
    %cst_10 = arith.constant dense<0.000000e+00> : vector<1x8xf32>
    %27 = vector.multi_reduction <add>, %26, %cst_10 [1] : vector<1x256x8xf32> to vector<1x8xf32>
    %cst_11 = arith.constant 3.906250e-03 : f32
    %28 = vector.broadcast %cst_11 : f32 to vector<1x8xf32>
    %29 = arith.mulf %27, %28 : vector<1x8xf32>
    %c0_12 = arith.constant 0 : index
    %c0_13 = arith.constant 0 : index
    %30 = vector.load %arg4[%c0_12, %c0_13] : memref<8x16xf32, #tpu.memory_space<vmem>>, vector<8x16xf32>
    %cst_14 = arith.constant dense<0.000000e+00> : vector<1x16xf32>
    %31 = tpu.matmul %29, %30, %cst_14 {dimension_numbers = #tpu.dot_dimension_numbers<[1], [0], [0], [1], [0, 0, 1, 1], [], []>} : vector<1x8xf32>, vector<8x16xf32>, vector<1x16xf32> -> vector<1x16xf32>
    %c0_15 = arith.constant 0 : index
    %c0_16 = arith.constant 0 : index
    %32 = vector.load %arg5[%c0_15, %c0_16] : memref<1x16xf32, #tpu.memory_space<vmem>>, vector<1x16xf32>
    %33 = arith.addf %31, %32 : vector<1x16xf32>
    %cst_17 = arith.constant 0.000000e+00 : f32
    %34 = vector.broadcast %cst_17 : f32 to vector<1x16xf32>
    %35 = arith.subf %34, %33 : vector<1x16xf32>
    %36 = math.exp %35 : vector<1x16xf32>
    %cst_18 = arith.constant 1.000000e+00 : f32
    %37 = vector.broadcast %cst_18 : f32 to vector<1x16xf32>
    %38 = arith.addf %37, %36 : vector<1x16xf32>
    %cst_19 = arith.constant 1.000000e+00 : f32
    %39 = vector.broadcast %cst_19 : f32 to vector<1x16xf32>
    %40 = arith.divf %39, %38 : vector<1x16xf32>
    %c0_20 = arith.constant 0 : index
    %c0_21 = arith.constant 0 : index
    %41 = vector.load %arg6[%c0_20, %c0_21] : memref<16x128xf32, #tpu.memory_space<vmem>>, vector<16x128xf32>
    %cst_22 = arith.constant dense<0.000000e+00> : vector<1x128xf32>
    %42 = tpu.matmul %40, %41, %cst_22 {dimension_numbers = #tpu.dot_dimension_numbers<[1], [0], [0], [1], [0, 0, 1, 1], [], []>} : vector<1x16xf32>, vector<16x128xf32>, vector<1x128xf32> -> vector<1x128xf32>
    %c0_23 = arith.constant 0 : index
    %c0_24 = arith.constant 0 : index
    %43 = vector.load %arg7[%c0_23, %c0_24] : memref<1x128xf32, #tpu.memory_space<vmem>>, vector<1x128xf32>
    %44 = arith.addf %42, %43 : vector<1x128xf32>
    %45 = vector.shape_cast %44 : vector<1x128xf32> to vector<1x1x128xf32>
    %c0_25 = arith.constant 0 : index
    %c0_26 = arith.constant 0 : index
    %c0_27 = arith.constant 0 : index
    %46 = vector.load %arg8[%c0_25, %c0_26, %c0_27] : memref<1x1x128xf32, #tpu.memory_space<vmem>>, vector<1x1x128xf32>
    tpu.vector_store %arg8[%c0_25, %c0_26, %c0_27], %45 {strides = array<i32>} : memref<1x1x128xf32, #tpu.memory_space<vmem>>, vector<1x1x128xf32>,
    return
  }
  func.func @transform_0(%arg0: i32) -> (i32, i32, i32, i32) {
    %c0_i32 = arith.constant 0 : i32
    %c0_i32_0 = arith.constant 0 : i32
    %c0_i32_1 = arith.constant 0 : i32
    %c0_i32_2 = arith.constant 0 : i32
    return %arg0, %c0_i32, %c0_i32_0, %c0_i32_1 : i32, i32, i32, i32
  }
  func.func @transform_1(%arg0: i32) -> (i32, i32) {
    %c0_i32 = arith.constant 0 : i32
    %c0_i32_0 = arith.constant 0 : i32
    %c0_i32_1 = arith.constant 0 : i32
    return %c0_i32, %c0_i32_0 : i32, i32
  }
  func.func @transform_2(%arg0: i32) -> (i32, i32) {
    %c0_i32 = arith.constant 0 : i32
    %c0_i32_0 = arith.constant 0 : i32
    %c0_i32_1 = arith.constant 0 : i32
    return %c0_i32, %c0_i32_0 : i32, i32
  }
  func.func @transform_3(%arg0: i32) -> (i32, i32) {
    %c0_i32 = arith.constant 0 : i32
    %c0_i32_0 = arith.constant 0 : i32
    %c0_i32_1 = arith.constant 0 : i32
    return %c0_i32, %c0_i32_0 : i32, i32
  }
  func.func @transform_4(%arg0: i32) -> (i32, i32) {
    %c0_i32 = arith.constant 0 : i32
    %c0_i32_0 = arith.constant 0 : i32
    %c0_i32_1 = arith.constant 0 : i32
    return %c0_i32, %c0_i32_0 : i32, i32
  }
  func.func @transform_5(%arg0: i32) -> (i32, i32) {
    %c0_i32 = arith.constant 0 : i32
    %c0_i32_0 = arith.constant 0 : i32
    %c0_i32_1 = arith.constant 0 : i32
    return %c0_i32, %c0_i32_0 : i32, i32
  }
  func.func @transform_6(%arg0: i32) -> (i32, i32) {
    %c0_i32 = arith.constant 0 : i32
    %c0_i32_0 = arith.constant 0 : i32
    %c0_i32_1 = arith.constant 0 : i32
    return %c0_i32, %c0_i32_0 : i32, i32
  }
  func.func @transform_7(%arg0: i32) -> (i32, i32, i32) {
    %c0_i32 = arith.constant 0 : i32
    %c0_i32_0 = arith.constant 0 : i32
    %c0_i32_1 = arith.constant 0 : i32
    return %arg0, %c0_i32, %c0_i32_0 : i32, i32, i32
  }
}

</mosaic_0001>

<llo_original>
// kernel: tpu_custom_call.1
$region0: #{tpu_custom_call.1}
  #allocation0 [shape = 'u32[]', space=smem, size = 0x4, offset = 0x4, fixed_abs, tag = 'smem constant byte address 0x4 - core index']
  #allocation1 [shape = 'u32[144,128]{1,0:T(1,128)}', space=vmem, size = 0x12000, scoped, tag = 'internal scratch']
  %s0 = inlined_call_operand.vmem [shape: f32[2,16,16,4], index: 0, kind: input, shape index: {}]
  %s1 = inlined_call_operand.vmem [shape: f32[36,8], index: 1, kind: input, shape index: {}]
  %s2 = inlined_call_operand.vmem [shape: f32[1,8], index: 2, kind: input, shape index: {}]
  %s3 = inlined_call_operand.vmem [shape: f32[8,16], index: 3, kind: input, shape index: {}]
  %s4 = inlined_call_operand.vmem [shape: f32[1,16], index: 4, kind: input, shape index: {}]
  %s5 = inlined_call_operand.vmem [shape: f32[16,128], index: 5, kind: input, shape index: {}]
  %s6 = inlined_call_operand.vmem [shape: f32[1,128], index: 6, kind: input, shape index: {}]
  %s7 = inlined_call_operand.hbm [shape: f32[2,1,128], index: 7, kind: output, shape index: {}]
  %s8 = sld [smem:[#allocation0]]
  $region61: #{tpu_custom_call.1} parent=0
    _
  %s10 = ssub.s32 1, %s8
  %s11 = scalar_select 0, %s10, %s8
  $region1: #{tpu_custom_call.1} parent=0
    #allocation2 [shape = 'u8[1024]{0}', space=vmem, size = 0x400, scoped, tag = 'output window, operand 0']
    #allocation3 [shape = 's32[2]{0}', space=sflag, size = 0x8, scoped, tag = 'scoped memory for tpu_custom_call.1']
    %12 = vsyncpa [#allocation3], 0
    %s13 = scalar_lea.sflag [#allocation3], 1
    %14 = vsyncpa %s13, 0
    loop: start=0, step=1, limit=4
    $region2: #{tpu_custom_call.1} parent=1 // loop_pre_header
      _
    $region3: #{tpu_custom_call.1} parent=1 // loop_header
      %s16 = sphi 0, %s20
      %p17 = scmp.ge.s32.totalorder %s16, 4
      %s26 = sphi 0, %s28
      %s29 = sphi 0, %s26
      %s30 = sphi 0, %s29
      %s46 = sphi 0, %s30
      %s50 = sphi 0, %s50
      %s52 = sphi 0, %s50
      %s53 = sphi 0, %s52
      %s67 = sphi 0, %s53
      %s71 = sphi 0, %s71
      %s73 = sphi 0, %s71
      %s74 = sphi 0, %s73
      %s88 = sphi 0, %s74
      %s92 = sphi 0, %s92
      %s94 = sphi 0, %s92
      %s95 = sphi 0, %s94
      %s109 = sphi 0, %s95
      %s113 = sphi 0, %s113
      %s115 = sphi 0, %s113
      %s116 = sphi 0, %s115
      %s130 = sphi 0, %s116
      %s134 = sphi 0, %s134
      %s136 = sphi 0, %s134
      %s137 = sphi 0, %s136
      %s151 = sphi 0, %s137
      %s155 = sphi 0, %s155
      %s157 = sphi 0, %s155
      %s158 = sphi 0, %s157
      %s172 = sphi 0, %s158
      %s178 = sphi 0, %s180
      %s181 = sphi 0, %s178
      %s182 = sphi 0, %s181
      %s198 = sphi 0, %s182
    $region4: #{tpu_custom_call.1} parent=1 // loop_header_branch
      %19 = sbr.rel (%p17) target = $region8
    $region5: #{tpu_custom_call.1} parent=1 // loop_body
      %s21 = ssub.s32 %s16, 1
      %s22 = ssub.s32 %s16, 2
      %s23 = sadd.s32 %s16, 1
      %s24 = ssub.s32 %s16, %s23
      %p25 = scmp.eq.s32.totalorder %s24, 0
      %s27 = sadd.s32 %s26, 1
      %s28 = scalar_select %p25, %s26, %s27
      %p31 = pneg %p25
      %p32 = scmp.eq.s32.totalorder %s16, 1
      %p33 = por %p31, %p32
      %p34 = scmp.ne.s32.totalorder %s26, %s29
      %p35 = scmp.eq.s32.totalorder %s16, 0
      %p36 = por %p34, %p35
      %p37 = scmp.ne.s32.totalorder %s26, %s29
      %p38 = scmp.eq.s32.totalorder %s21, 1
      %p39 = por %p37, %p38
      %p40 = scmp.ne.s32.totalorder %s29, %s30
      %p41 = scmp.eq.s32.totalorder %s21, 0
      %p42 = por %p40, %p41
      %p43 = scmp.ne.s32.totalorder %s29, %s30
      %p44 = scmp.eq.s32.totalorder %s22, 1
      %p45 = por %p43, %p44
      %p47 = scmp.ne.s32.totalorder %s30, %s46
      %p48 = scmp.eq.s32.totalorder %s22, 0
      %p49 = por %p47, %p48
      %s51 = sadd.s32 %s50, 1
      %p54 = scmp.eq.s32.totalorder %s16, 1
      %p55 = scmp.ne.s32.totalorder %s50, %s52
      %p56 = scmp.eq.s32.totalorder %s16, 0
      %p57 = por %p55, %p56
      %p58 = scmp.ne.s32.totalorder %s50, %s52
      %p59 = scmp.eq.s32.totalorder %s21, 1
      %p60 = por %p58, %p59
      %p61 = scmp.ne.s32.totalorder %s52, %s53
      %p62 = scmp.eq.s32.totalorder %s21, 0
      %p63 = por %p61, %p62
      %p64 = scmp.ne.s32.totalorder %s52, %s53
      %p65 = scmp.eq.s32.totalorder %s22, 1
      %p66 = por %p64, %p65
      %p68 = scmp.ne.s32.totalorder %s53, %s67
      %p69 = scmp.eq.s32.totalorder %s22, 0
      %p70 = por %p68, %p69
      %s72 = sadd.s32 %s71, 1
      %p75 = scmp.eq.s32.totalorder %s16, 1
      %p76 = scmp.ne.s32.totalorder %s71, %s73
      %p77 = scmp.eq.s32.totalorder %s16, 0
      %p78 = por %p76, %p77
      %p79 = scmp.ne.s32.totalorder %s71, %s73
      %p80 = scmp.eq.s32.totalorder %s21, 1
      %p81 = por %p79, %p80
      %p82 = scmp.ne.s32.totalorder %s73, %s74
      %p83 = scmp.eq.s32.totalorder %s21, 0
      %p84 = por %p82, %p83
      %p85 = scmp.ne.s32.totalorder %s73, %s74
      %p86 = scmp.eq.s32.totalorder %s22, 1
      %p87 = por %p85, %p86
      %p89 = scmp.ne.s32.totalorder %s74, %s88
      %p90 = scmp.eq.s32.totalorder %s22, 0
      %p91 = por %p89, %p90
      %s93 = sadd.s32 %s92, 1
      %p96 = scmp.eq.s32.totalorder %s16, 1
      %p97 = scmp.ne.s32.totalorder %s92, %s94
      %p98 = scmp.eq.s32.totalorder %s16, 0
      %p99 = por %p97, %p98
      %p100 = scmp.ne.s32.totalorder %s92, %s94
      %p101 = scmp.eq.s32.totalorder %s21, 1
      %p102 = por %p100, %p101
      %p103 = scmp.ne.s32.totalorder %s94, %s95
      %p104 = scmp.eq.s32.totalorder %s21, 0
      %p105 = por %p103, %p104
      %p106 = scmp.ne.s32.totalorder %s94, %s95
      %p107 = scmp.eq.s32.totalorder %s22, 1
      %p108 = por %p106, %p107
      %p110 = scmp.ne.s32.totalorder %s95, %s109
      %p111 = scmp.eq.s32.totalorder %s22, 0
      %p112 = por %p110, %p111
      %s114 = sadd.s32 %s113, 1
      %p117 = scmp.eq.s32.totalorder %s16, 1
      %p118 = scmp.ne.s32.totalorder %s113, %s115
      %p119 = scmp.eq.s32.totalorder %s16, 0
      %p120 = por %p118, %p119
      %p121 = scmp.ne.s32.totalorder %s113, %s115
      %p122 = scmp.eq.s32.totalorder %s21, 1
      %p123 = por %p121, %p122
      %p124 = scmp.ne.s32.totalorder %s115, %s116
      %p125 = scmp.eq.s32.totalorder %s21, 0
      %p126 = por %p124, %p125
      %p127 = scmp.ne.s32.totalorder %s115, %s116
      %p128 = scmp.eq.s32.totalorder %s22, 1
      %p129 = por %p127, %p128
      %p131 = scmp.ne.s32.totalorder %s116, %s130
      %p132 = scmp.eq.s32.totalorder %s22, 0
      %p133 = por %p131, %p132
      %s135 = sadd.s32 %s134, 1
      %p138 = scmp.eq.s32.totalorder %s16, 1
      %p139 = scmp.ne.s32.totalorder %s134, %s136
      %p140 = scmp.eq.s32.totalorder %s16, 0
      %p141 = por %p139, %p140
      %p142 = scmp.ne.s32.totalorder %s134, %s136
      %p143 = scmp.eq.s32.totalorder %s21, 1
      %p144 = por %p142, %p143
      %p145 = scmp.ne.s32.totalorder %s136, %s137
      %p146 = scmp.eq.s32.totalorder %s21, 0
      %p147 = por %p145, %p146
      %p148 = scmp.ne.s32.totalorder %s136, %s137
      %p149 = scmp.eq.s32.totalorder %s22, 1
      %p150 = por %p148, %p149
      %p152 = scmp.ne.s32.totalorder %s137, %s151
      %p153 = scmp.eq.s32.totalorder %s22, 0
      %p154 = por %p152, %p153
      %s156 = sadd.s32 %s155, 1
      %p159 = scmp.eq.s32.totalorder %s16, 1
      %p160 = scmp.ne.s32.totalorder %s155, %s157
      %p161 = scmp.eq.s32.totalorder %s16, 0
      %p162 = por %p160, %p161
      %p163 = scmp.ne.s32.totalorder %s155, %s157
      %p164 = scmp.eq.s32.totalorder %s21, 1
      %p165 = por %p163, %p164
      %p166 = scmp.ne.s32.totalorder %s157, %s158
      %p167 = scmp.eq.s32.totalorder %s21, 0
      %p168 = por %p166, %p167
      %p169 = scmp.ne.s32.totalorder %s157, %s158
      %p170 = scmp.eq.s32.totalorder %s22, 1
      %p171 = por %p169, %p170
      %p173 = scmp.ne.s32.totalorder %s158, %s172
      %p174 = scmp.eq.s32.totalorder %s22, 0
      %p175 = por %p173, %p174
      %s176 = ssub.s32 %s16, %s23
      %p177 = scmp.eq.s32.totalorder %s176, 0
      %s179 = sadd.s32 %s178, 1
      %s180 = scalar_select %p177, %s178, %s179
      %p183 = pneg %p177
      %p184 = scmp.eq.s32.totalorder %s16, 1
      %p185 = por %p183, %p184
      %p186 = scmp.ne.s32.totalorder %s178, %s181
      %p187 = scmp.eq.s32.totalorder %s16, 0
      %p188 = por %p186, %p187
      %p189 = scmp.ne.s32.totalorder %s178, %s181
      %p190 = scmp.eq.s32.totalorder %s21, 1
      %p191 = por %p189, %p190
      %p192 = scmp.ne.s32.totalorder %s181, %s182
      %p193 = scmp.eq.s32.totalorder %s21, 0
      %p194 = por %p192, %p193
      %p195 = scmp.ne.s32.totalorder %s181, %s182
      %p196 = scmp.eq.s32.totalorder %s22, 1
      %p197 = por %p195, %p196
      %p199 = scmp.ne.s32.totalorder %s182, %s198
      %p200 = scmp.eq.s32.totalorder %s22, 0
      %p201 = por %p199, %p200
      %p202 = scmp.le.s32.totalorder 1, %s16
      %p203 = scmp.lt.s32.totalorder %s16, 3
      %p204 = pnand %p202, %p203
      %p205 = pneg %p204
      // Predicated region
      $region9: #{tpu_custom_call.1} parent=5 // pred_check
        _
      $region10: #{tpu_custom_call.1} parent=5 // pred_check_branch
        %207 = sbr.rel (%p204) target = $region12
      $region11: #{tpu_custom_call.1} parent=5 // pred_region
        %s208 = ssub.s32 %s16, 1
        // Predicated region
        $region13: #{tpu_custom_call.1} parent=11 // pred_check
          %p209 = pneg %p63
        $region14: #{tpu_custom_call.1} parent=11 // pred_check_branch
          %211 = sbr.rel (%p209) target = $region16
        $region15: #{tpu_custom_call.1} parent=11 // pred_region
          _
        $region16: #{tpu_custom_call.1} parent=11 // pred_fallthru
          _
        // Predicated region
        $region17: #{tpu_custom_call.1} parent=11 // pred_check
          %p212 = pneg %p84
        $region18: #{tpu_custom_call.1} parent=11 // pred_check_branch
          %214 = sbr.rel (%p212) target = $region20
        $region19: #{tpu_custom_call.1} parent=11 // pred_region
          _
        $region20: #{tpu_custom_call.1} parent=11 // pred_fallthru
          _
        // Predicated region
        $region21: #{tpu_custom_call.1} parent=11 // pred_check
          %p215 = pneg %p105
        $region22: #{tpu_custom_call.1} parent=11 // pred_check_branch
          %217 = sbr.rel (%p215) target = $region24
        $region23: #{tpu_custom_call.1} parent=11 // pred_region
          _
        $region24: #{tpu_custom_call.1} parent=11 // pred_fallthru
          _
        // Predicated region
        $region25: #{tpu_custom_call.1} parent=11 // pred_check
          %p218 = pneg %p126
        $region26: #{tpu_custom_call.1} parent=11 // pred_check_branch
          %220 = sbr.rel (%p218) target = $region28
        $region27: #{tpu_custom_call.1} parent=11 // pred_region
          _
        $region28: #{tpu_custom_call.1} parent=11 // pred_fallthru
          _
        // Predicated region
        $region29: #{tpu_custom_call.1} parent=11 // pred_check
          %p221 = pneg %p147
        $region30: #{tpu_custom_call.1} parent=11 // pred_check_branch
          %223 = sbr.rel (%p221) target = $region32
        $region31: #{tpu_custom_call.1} parent=11 // pred_region
          _
        $region32: #{tpu_custom_call.1} parent=11 // pred_fallthru
          _
        // Predicated region
        $region33: #{tpu_custom_call.1} parent=11 // pred_check
          %p224 = pneg %p168
        $region34: #{tpu_custom_call.1} parent=11 // pred_check_branch
          %226 = sbr.rel (%p224) target = $region36
        $region35: #{tpu_custom_call.1} parent=11 // pred_region
          _
        $region36: #{tpu_custom_call.1} parent=11 // pred_fallthru
          _
      $region12: #{tpu_custom_call.1} parent=5 // pred_fallthru
        _
      %p227 = scmp.lt.s32.totalorder %s16, 2
      // Predicated region
      $region37: #{tpu_custom_call.1} parent=5 // pred_check
        %p228 = pneg %p227
      $region38: #{tpu_custom_call.1} parent=5 // pred_check_branch
        %230 = sbr.rel (%p228) target = $region40
      $region39: #{tpu_custom_call.1} parent=5 // pred_region
        // Predicated region
        $region41: #{tpu_custom_call.1} parent=39 // pred_check
          %p231 = pneg %p36
        $region42: #{tpu_custom_call.1} parent=39 // pred_check_branch
          %233 = sbr.rel (%p231) target = $region44
        $region43: #{tpu_custom_call.1} parent=39 // pred_region
          %p234 = scmp.lt.s32.totalorder %s16, 1
          %s235 = scalar_select %p234, %s16, 1
          %s236 = smul.addr %s235, 32
          %s237 = smul.addr %s236, 8
          %s238 = scalar_lea.vmem %s0, %s237
        $region44: #{tpu_custom_call.1} parent=39 // pred_fallthru
          _
      $region40: #{tpu_custom_call.1} parent=5 // pred_fallthru
        _
      %p239 = scmp.le.s32.totalorder 1, %s16
      %p240 = scmp.lt.s32.totalorder %s16, 3
      %p241 = pnand %p239, %p240
      %p242 = pneg %p241
      // Predicated region
      $region45: #{tpu_custom_call.1} parent=5 // pred_check
        _
      $region46: #{tpu_custom_call.1} parent=5 // pred_check_branch
        %244 = sbr.rel (%p241) target = $region48
      $region47: #{tpu_custom_call.1} parent=5 // pred_region
        %s245 = ssub.s32 %s16, 1
        %p246 = scmp.lt.s32.totalorder %s21, 1
        %s247 = scalar_select %p246, %s21, 1
        %s248 = smul.addr %s247, 32
        %s249 = smul.addr %s248, 8
        %s250 = scalar_lea.vmem %s0, %s249
        %p251 = pneg %p42
        %p252 = pneg %p39
        %p253 = pneg %p63
        %p254 = pneg %p60
        %p255 = pneg %p84
        %p256 = pneg %p81
        %p257 = pneg %p105
        %p258 = pneg %p102
        %p259 = pneg %p126
        %p260 = pneg %p123
        %p261 = pneg %p147
        %p262 = pneg %p144
        %p263 = pneg %p168
        %p264 = pneg %p165
        %p265 = pneg %p194
        %p266 = pneg %p191
        %s267 = sand.u32 %s181, 1
        %s268 = scalar_lea.sflag [#allocation3], %s267
        %s269 = sand.u32 %s181, 1
        %s270 = scalar_lea.vmem [#allocation2], %s269
        %p271 = scmp.lt.s32.totalorder %s21, 1
        %s272 = scalar_select %p271, %s21, 1
        %s273 = smul.addr %s272, 32
        %s274 = smul.addr %s273, 8
        %s275 = scalar_lea.vmem %s0, %s274
        %v276 = vld [vmem:[%s275] sm:$0xff]
        %v277 = vld [vmem:[%s275 + $0x8] sm:$0xff]
        %v278 = vld [vmem:[%s275 + $0x10] sm:$0xff]
        %v279 = vld [vmem:[%s275 + $0x18] sm:$0xff]
        %v280 = vld [vmem:[%s275 + $0x20] sm:$0xff]
        %v281 = vld [vmem:[%s275 + $0x28] sm:$0xff]
        %v282 = vld [vmem:[%s275 + $0x30] sm:$0xff]
        %v283 = vld [vmem:[%s275 + $0x38] sm:$0xff]
        %v284 = vld [vmem:[%s275 + $0x40] sm:$0xff]
        %v285 = vld [vmem:[%s275 + $0x48] sm:$0xff]
        %v286 = vld [vmem:[%s275 + $0x50] sm:$0xff]
        %v287 = vld [vmem:[%s275 + $0x58] sm:$0xff]
        %v288 = vld [vmem:[%s275 + $0x60] sm:$0xff]
        %v289 = vld [vmem:[%s275 + $0x68] sm:$0xff]
        %v290 = vld [vmem:[%s275 + $0x70] sm:$0xff]
        %v291 = vld [vmem:[%s275 + $0x78] sm:$0xff]
        %v292 = vld [vmem:[%s275 + $0x80] sm:$0xff]
        %v293 = vld [vmem:[%s275 + $0x88] sm:$0xff]
        %v294 = vld [vmem:[%s275 + $0x90] sm:$0xff]
        %v295 = vld [vmem:[%s275 + $0x98] sm:$0xff]
        %v296 = vld [vmem:[%s275 + $0xa0] sm:$0xff]
        %v297 = vld [vmem:[%s275 + $0xa8] sm:$0xff]
        %v298 = vld [vmem:[%s275 + $0xb0] sm:$0xff]
        %v299 = vld [vmem:[%s275 + $0xb8] sm:$0xff]
        %v300 = vld [vmem:[%s275 + $0xc0] sm:$0xff]
        %v301 = vld [vmem:[%s275 + $0xc8] sm:$0xff]
        %v302 = vld [vmem:[%s275 + $0xd0] sm:$0xff]
        %v303 = vld [vmem:[%s275 + $0xd8] sm:$0xff]
        %v304 = vld [vmem:[%s275 + $0xe0] sm:$0xff]
        %v305 = vld [vmem:[%s275 + $0xe8] sm:$0xff]
        %v306 = vld [vmem:[%s275 + $0xf0] sm:$0xff]
        %v307 = vld [vmem:[%s275 + $0xf8] sm:$0xff]
        %vm341 = vcmask 1040384
        %v342 = vrot.slane 0.0, 7
        %v343 = vsel %vm341, %v342, %v342
        %v344 = vrot.slane %v276, 7
        %v345 = vrot.slane %v277, 7
        %v346 = vsel %vm341, %v344, %v345
        %v347 = vrot.slane %v278, 7
        %v348 = vrot.slane %v279, 7
        %v349 = vsel %vm341, %v347, %v348
        %v350 = vrot.slane %v280, 7
        %v351 = vrot.slane %v281, 7
        %v352 = vsel %vm341, %v350, %v351
        %v353 = vrot.slane %v282, 7
        %v354 = vrot.slane %v283, 7
        %v355 = vsel %vm341, %v353, %v354
        %v356 = vrot.slane %v284, 7
        %v357 = vrot.slane %v285, 7
        %v358 = vsel %vm341, %v356, %v357
        %v359 = vrot.slane %v286, 7
        %v360 = vrot.slane %v287, 7
        %v361 = vsel %vm341, %v359, %v360
        %v362 = vrot.slane %v288, 7
        %v363 = vrot.slane %v289, 7
        %v364 = vsel %vm341, %v362, %v363
        %v365 = vrot.slane %v290, 7
        %v366 = vrot.slane %v291, 7
        %v367 = vsel %vm341, %v365, %v366
        %v368 = vrot.slane %v292, 7
        %v369 = vrot.slane %v293, 7
        %v370 = vsel %vm341, %v368, %v369
        %v371 = vrot.slane %v294, 7
        %v372 = vrot.slane %v295, 7
        %v373 = vsel %vm341, %v371, %v372
        %v374 = vrot.slane %v296, 7
        %v375 = vrot.slane %v297, 7
        %v376 = vsel %vm341, %v374, %v375
        %v377 = vrot.slane %v298, 7
        %v378 = vrot.slane %v299, 7
        %v379 = vsel %vm341, %v377, %v378
        %v380 = vrot.slane %v300, 7
        %v381 = vrot.slane %v301, 7
        %v382 = vsel %vm341, %v380, %v381
        %v383 = vrot.slane %v302, 7
        %v384 = vrot.slane %v303, 7
        %v385 = vsel %vm341, %v383, %v384
        %v386 = vrot.slane %v304, 7
        %v387 = vrot.slane %v305, 7
        %v388 = vsel %vm341, %v386, %v387
        %v389 = vrot.slane %v306, 7
        %v390 = vrot.slane %v307, 7
        %v391 = vsel %vm341, %v389, %v390
        %v425 = vsel %vm341, 0.0, %v342
        %v426 = vsel %vm341, 0.0, %v344
        %v427 = vsel %vm341, 0.0, %v347
        %v428 = vsel %vm341, 0.0, %v350
        %v429 = vsel %vm341, 0.0, %v353
        %v430 = vsel %vm341, 0.0, %v356
        %v431 = vsel %vm341, 0.0, %v359
        %v432 = vsel %vm341, 0.0, %v362
        %v433 = vsel %vm341, 0.0, %v365
        %v434 = vsel %vm341, 0.0, %v368
        %v435 = vsel %vm341, 0.0, %v371
        %v436 = vsel %vm341, 0.0, %v374
        %v437 = vsel %vm341, 0.0, %v377
        %v438 = vsel %vm341, 0.0, %v380
        %v439 = vsel %vm341, 0.0, %v383
        %v440 = vsel %vm341, 0.0, %v386
        %v441 = vsel %vm341, 0.0, %v389
        %vm442 = vcmask 1046528
        %v443 = vrot.slane 0.0, 1
        %v444 = vsel %vm442, %v443, %v443
        %v445 = vrot.slane %v276, 1
        %v446 = vrot.slane %v277, 1
        %v447 = vsel %vm442, %v445, %v446
        %v448 = vrot.slane %v278, 1
        %v449 = vrot.slane %v279, 1
        %v450 = vsel %vm442, %v448, %v449
        %v451 = vrot.slane %v280, 1
        %v452 = vrot.slane %v281, 1
        %v453 = vsel %vm442, %v451, %v452
        %v454 = vrot.slane %v282, 1
        %v455 = vrot.slane %v283, 1
        %v456 = vsel %vm442, %v454, %v455
        %v457 = vrot.slane %v284, 1
        %v458 = vrot.slane %v285, 1
        %v459 = vsel %vm442, %v457, %v458
        %v460 = vrot.slane %v286, 1
        %v461 = vrot.slane %v287, 1
        %v462 = vsel %vm442, %v460, %v461
        %v463 = vrot.slane %v288, 1
        %v464 = vrot.slane %v289, 1
        %v465 = vsel %vm442, %v463, %v464
        %v466 = vrot.slane %v290, 1
        %v467 = vrot.slane %v291, 1
        %v468 = vsel %vm442, %v466, %v467
        %v469 = vrot.slane %v292, 1
        %v470 = vrot.slane %v293, 1
        %v471 = vsel %vm442, %v469, %v470
        %v472 = vrot.slane %v294, 1
        %v473 = vrot.slane %v295, 1
        %v474 = vsel %vm442, %v472, %v473
        %v475 = vrot.slane %v296, 1
        %v476 = vrot.slane %v297, 1
        %v477 = vsel %vm442, %v475, %v476
        %v478 = vrot.slane %v298, 1
        %v479 = vrot.slane %v299, 1
        %v480 = vsel %vm442, %v478, %v479
        %v481 = vrot.slane %v300, 1
        %v482 = vrot.slane %v301, 1
        %v483 = vsel %vm442, %v481, %v482
        %v484 = vrot.slane %v302, 1
        %v485 = vrot.slane %v303, 1
        %v486 = vsel %vm442, %v484, %v485
        %v487 = vrot.slane %v304, 1
        %v488 = vrot.slane %v305, 1
        %v489 = vsel %vm442, %v487, %v488
        %v490 = vrot.slane %v306, 1
        %v491 = vrot.slane %v307, 1
        %v492 = vsel %vm442, %v490, %v491
        %v510 = vsel %vm442, %v443, 0.0
        %v511 = vsel %vm442, %v446, 0.0
        %v512 = vsel %vm442, %v449, 0.0
        %v513 = vsel %vm442, %v452, 0.0
        %v514 = vsel %vm442, %v455, 0.0
        %v515 = vsel %vm442, %v458, 0.0
        %v516 = vsel %vm442, %v461, 0.0
        %v517 = vsel %vm442, %v464, 0.0
        %v518 = vsel %vm442, %v467, 0.0
        %v519 = vsel %vm442, %v470, 0.0
        %v520 = vsel %vm442, %v473, 0.0
        %v521 = vsel %vm442, %v476, 0.0
        %v522 = vsel %vm442, %v479, 0.0
        %v523 = vsel %vm442, %v482, 0.0
        %v524 = vsel %vm442, %v485, 0.0
        %v525 = vsel %vm442, %v488, 0.0
        %v526 = vsel %vm442, %v491, 0.0
        %527 = vrot.lane.b32.xlu0 0.0, 4
        %v528 = vpop.permute.xlu0 %527
        %529 = vrot.lane.b32.xlu0 %v276, 4
        %v530 = vpop.permute.xlu0 %529
        %531 = vrot.lane.b32.xlu0 %v277, 4
        %v532 = vpop.permute.xlu0 %531
        %533 = vrot.lane.b32.xlu0 %v278, 4
        %v534 = vpop.permute.xlu0 %533
        %535 = vrot.lane.b32.xlu0 %v279, 4
        %v536 = vpop.permute.xlu0 %535
        %537 = vrot.lane.b32.xlu0 %v280, 4
        %v538 = vpop.permute.xlu0 %537
        %539 = vrot.lane.b32.xlu0 %v281, 4
        %v540 = vpop.permute.xlu0 %539
        %541 = vrot.lane.b32.xlu0 %v282, 4
        %v542 = vpop.permute.xlu0 %541
        %543 = vrot.lane.b32.xlu0 %v283, 4
        %v544 = vpop.permute.xlu0 %543
        %545 = vrot.lane.b32.xlu0 %v284, 4
        %v546 = vpop.permute.xlu0 %545
        %547 = vrot.lane.b32.xlu0 %v285, 4
        %v548 = vpop.permute.xlu0 %547
        %549 = vrot.lane.b32.xlu0 %v286, 4
        %v550 = vpop.permute.xlu0 %549
        %551 = vrot.lane.b32.xlu0 %v287, 4
        %v552 = vpop.permute.xlu0 %551
        %553 = vrot.lane.b32.xlu0 %v288, 4
        %v554 = vpop.permute.xlu0 %553
        %555 = vrot.lane.b32.xlu0 %v289, 4
        %v556 = vpop.permute.xlu0 %555
        %557 = vrot.lane.b32.xlu0 %v290, 4
        %v558 = vpop.permute.xlu0 %557
        %559 = vrot.lane.b32.xlu0 %v291, 4
        %v560 = vpop.permute.xlu0 %559
        %561 = vrot.lane.b32.xlu0 %v292, 4
        %v562 = vpop.permute.xlu0 %561
        %563 = vrot.lane.b32.xlu0 %v293, 4
        %v564 = vpop.permute.xlu0 %563
        %565 = vrot.lane.b32.xlu0 %v294, 4
        %v566 = vpop.permute.xlu0 %565
        %567 = vrot.lane.b32.xlu0 %v295, 4
        %v568 = vpop.permute.xlu0 %567
        %569 = vrot.lane.b32.xlu0 %v296, 4
        %v570 = vpop.permute.xlu0 %569
        %571 = vrot.lane.b32.xlu0 %v297, 4
        %v572 = vpop.permute.xlu0 %571
        %573 = vrot.lane.b32.xlu0 %v298, 4
        %v574 = vpop.permute.xlu0 %573
        %575 = vrot.lane.b32.xlu0 %v299, 4
        %v576 = vpop.permute.xlu0 %575
        %577 = vrot.lane.b32.xlu0 %v300, 4
        %v578 = vpop.permute.xlu0 %577
        %579 = vrot.lane.b32.xlu0 %v301, 4
        %v580 = vpop.permute.xlu0 %579
        %581 = vrot.lane.b32.xlu0 %v302, 4
        %v582 = vpop.permute.xlu0 %581
        %583 = vrot.lane.b32.xlu0 %v303, 4
        %v584 = vpop.permute.xlu0 %583
        %585 = vrot.lane.b32.xlu0 %v304, 4
        %v586 = vpop.permute.xlu0 %585
        %587 = vrot.lane.b32.xlu0 %v305, 4
        %v588 = vpop.permute.xlu0 %587
        %636 = vrot.lane.b32.xlu0 %v444, 8
        %v637 = vpop.permute.xlu0 %636
        %638 = vrot.lane.b32.xlu0 %v510, 8
        %v639 = vpop.permute.xlu0 %638
        %640 = vrot.lane.b32.xlu0 %v447, 8
        %v641 = vpop.permute.xlu0 %640
        %642 = vrot.lane.b32.xlu0 %v511, 8
        %v643 = vpop.permute.xlu0 %642
        %644 = vrot.lane.b32.xlu0 %v450, 8
        %v645 = vpop.permute.xlu0 %644
        %646 = vrot.lane.b32.xlu0 %v512, 8
        %v647 = vpop.permute.xlu0 %646
        %648 = vrot.lane.b32.xlu0 %v453, 8
        %v649 = vpop.permute.xlu0 %648
        %650 = vrot.lane.b32.xlu0 %v513, 8
        %v651 = vpop.permute.xlu0 %650
        %652 = vrot.lane.b32.xlu0 %v456, 8
        %v653 = vpop.permute.xlu0 %652
        %654 = vrot.lane.b32.xlu0 %v514, 8
        %v655 = vpop.permute.xlu0 %654
        %656 = vrot.lane.b32.xlu0 %v459, 8
        %v657 = vpop.permute.xlu0 %656
        %658 = vrot.lane.b32.xlu0 %v515, 8
        %v659 = vpop.permute.xlu0 %658
        %660 = vrot.lane.b32.xlu0 %v462, 8
        %v661 = vpop.permute.xlu0 %660
        %662 = vrot.lane.b32.xlu0 %v516, 8
        %v663 = vpop.permute.xlu0 %662
        %664 = vrot.lane.b32.xlu0 %v465, 8
        %v665 = vpop.permute.xlu0 %664
        %666 = vrot.lane.b32.xlu0 %v517, 8
        %v667 = vpop.permute.xlu0 %666
        %668 = vrot.lane.b32.xlu0 %v468, 8
        %v669 = vpop.permute.xlu0 %668
        %670 = vrot.lane.b32.xlu0 %v518, 8
        %v671 = vpop.permute.xlu0 %670
        %672 = vrot.lane.b32.xlu0 %v471, 8
        %v673 = vpop.permute.xlu0 %672
        %674 = vrot.lane.b32.xlu0 %v519, 8
        %v675 = vpop.permute.xlu0 %674
        %676 = vrot.lane.b32.xlu0 %v474, 8
        %v677 = vpop.permute.xlu0 %676
        %678 = vrot.lane.b32.xlu0 %v520, 8
        %v679 = vpop.permute.xlu0 %678
        %680 = vrot.lane.b32.xlu0 %v477, 8
        %v681 = vpop.permute.xlu0 %680
        %682 = vrot.lane.b32.xlu0 %v521, 8
        %v683 = vpop.permute.xlu0 %682
        %684 = vrot.lane.b32.xlu0 %v480, 8
        %v685 = vpop.permute.xlu0 %684
        %686 = vrot.lane.b32.xlu0 %v522, 8
        %v687 = vpop.permute.xlu0 %686
        %688 = vrot.lane.b32.xlu0 %v483, 8
        %v689 = vpop.permute.xlu0 %688
        %690 = vrot.lane.b32.xlu0 %v523, 8
        %v691 = vpop.permute.xlu0 %690
        %692 = vrot.lane.b32.xlu0 %v486, 8
        %v693 = vpop.permute.xlu0 %692
        %694 = vrot.lane.b32.xlu0 %v524, 8
        %v695 = vpop.permute.xlu0 %694
        %696 = vrot.lane.b32.xlu0 %v489, 8
        %v697 = vpop.permute.xlu0 %696
        %698 = vrot.lane.b32.xlu0 %v525, 8
        %v699 = vpop.permute.xlu0 %698
        %748 = vrot.lane.b32.xlu0 %v426, 12
        %v749 = vpop.permute.xlu0 %748
        %750 = vrot.lane.b32.xlu0 %v346, 12
        %v751 = vpop.permute.xlu0 %750
        %752 = vrot.lane.b32.xlu0 %v427, 12
        %v753 = vpop.permute.xlu0 %752
        %754 = vrot.lane.b32.xlu0 %v349, 12
        %v755 = vpop.permute.xlu0 %754
        %756 = vrot.lane.b32.xlu0 %v428, 12
        %v757 = vpop.permute.xlu0 %756
        %758 = vrot.lane.b32.xlu0 %v352, 12
        %v759 = vpop.permute.xlu0 %758
        %760 = vrot.lane.b32.xlu0 %v429, 12
        %v761 = vpop.permute.xlu0 %760
        %762 = vrot.lane.b32.xlu0 %v355, 12
        %v763 = vpop.permute.xlu0 %762
        %764 = vrot.lane.b32.xlu0 %v430, 12
        %v765 = vpop.permute.xlu0 %764
        %766 = vrot.lane.b32.xlu0 %v358, 12
        %v767 = vpop.permute.xlu0 %766
        %768 = vrot.lane.b32.xlu0 %v431, 12
        %v769 = vpop.permute.xlu0 %768
        %770 = vrot.lane.b32.xlu0 %v361, 12
        %v771 = vpop.permute.xlu0 %770
        %772 = vrot.lane.b32.xlu0 %v432, 12
        %v773 = vpop.permute.xlu0 %772
        %774 = vrot.lane.b32.xlu0 %v364, 12
        %v775 = vpop.permute.xlu0 %774
        %776 = vrot.lane.b32.xlu0 %v433, 12
        %v777 = vpop.permute.xlu0 %776
        %778 = vrot.lane.b32.xlu0 %v367, 12
        %v779 = vpop.permute.xlu0 %778
        %780 = vrot.lane.b32.xlu0 %v434, 12
        %v781 = vpop.permute.xlu0 %780
        %782 = vrot.lane.b32.xlu0 %v370, 12
        %v783 = vpop.permute.xlu0 %782
        %784 = vrot.lane.b32.xlu0 %v435, 12
        %v785 = vpop.permute.xlu0 %784
        %786 = vrot.lane.b32.xlu0 %v373, 12
        %v787 = vpop.permute.xlu0 %786
        %788 = vrot.lane.b32.xlu0 %v436, 12
        %v789 = vpop.permute.xlu0 %788
        %790 = vrot.lane.b32.xlu0 %v376, 12
        %v791 = vpop.permute.xlu0 %790
        %792 = vrot.lane.b32.xlu0 %v437, 12
        %v793 = vpop.permute.xlu0 %792
        %794 = vrot.lane.b32.xlu0 %v379, 12
        %v795 = vpop.permute.xlu0 %794
        %796 = vrot.lane.b32.xlu0 %v438, 12
        %v797 = vpop.permute.xlu0 %796
        %798 = vrot.lane.b32.xlu0 %v382, 12
        %v799 = vpop.permute.xlu0 %798
        %800 = vrot.lane.b32.xlu0 %v439, 12
        %v801 = vpop.permute.xlu0 %800
        %802 = vrot.lane.b32.xlu0 %v385, 12
        %v803 = vpop.permute.xlu0 %802
        %804 = vrot.lane.b32.xlu0 %v440, 12
        %v805 = vpop.permute.xlu0 %804
        %806 = vrot.lane.b32.xlu0 %v388, 12
        %v807 = vpop.permute.xlu0 %806
        %808 = vrot.lane.b32.xlu0 %v441, 12
        %v809 = vpop.permute.xlu0 %808
        %810 = vrot.lane.b32.xlu0 %v391, 12
        %v811 = vpop.permute.xlu0 %810
        %844 = vrot.lane.b32.xlu0 %v276, 16
        %v845 = vpop.permute.xlu0 %844
        %846 = vrot.lane.b32.xlu0 %v277, 16
        %v847 = vpop.permute.xlu0 %846
        %848 = vrot.lane.b32.xlu0 %v278, 16
        %v849 = vpop.permute.xlu0 %848
        %850 = vrot.lane.b32.xlu0 %v279, 16
        %v851 = vpop.permute.xlu0 %850
        %852 = vrot.lane.b32.xlu0 %v280, 16
        %v853 = vpop.permute.xlu0 %852
        %854 = vrot.lane.b32.xlu0 %v281, 16
        %v855 = vpop.permute.xlu0 %854
        %856 = vrot.lane.b32.xlu0 %v282, 16
        %v857 = vpop.permute.xlu0 %856
        %858 = vrot.lane.b32.xlu0 %v283, 16
        %v859 = vpop.permute.xlu0 %858
        %860 = vrot.lane.b32.xlu0 %v284, 16
        %v861 = vpop.permute.xlu0 %860
        %862 = vrot.lane.b32.xlu0 %v285, 16
        %v863 = vpop.permute.xlu0 %862
        %864 = vrot.lane.b32.xlu0 %v286, 16
        %v865 = vpop.permute.xlu0 %864
        %866 = vrot.lane.b32.xlu0 %v287, 16
        %v867 = vpop.permute.xlu0 %866
        %868 = vrot.lane.b32.xlu0 %v288, 16
        %v869 = vpop.permute.xlu0 %868
        %870 = vrot.lane.b32.xlu0 %v289, 16
        %v871 = vpop.permute.xlu0 %870
        %872 = vrot.lane.b32.xlu0 %v290, 16
        %v873 = vpop.permute.xlu0 %872
        %874 = vrot.lane.b32.xlu0 %v291, 16
        %v875 = vpop.permute.xlu0 %874
        %876 = vrot.lane.b32.xlu0 %v292, 16
        %v877 = vpop.permute.xlu0 %876
        %878 = vrot.lane.b32.xlu0 %v293, 16
        %v879 = vpop.permute.xlu0 %878
        %880 = vrot.lane.b32.xlu0 %v294, 16
        %v881 = vpop.permute.xlu0 %880
        %882 = vrot.lane.b32.xlu0 %v295, 16
        %v883 = vpop.permute.xlu0 %882
        %884 = vrot.lane.b32.xlu0 %v296, 16
        %v885 = vpop.permute.xlu0 %884
        %886 = vrot.lane.b32.xlu0 %v297, 16
        %v887 = vpop.permute.xlu0 %886
        %888 = vrot.lane.b32.xlu0 %v298, 16
        %v889 = vpop.permute.xlu0 %888
        %890 = vrot.lane.b32.xlu0 %v299, 16
        %v891 = vpop.permute.xlu0 %890
        %892 = vrot.lane.b32.xlu0 %v300, 16
        %v893 = vpop.permute.xlu0 %892
        %894 = vrot.lane.b32.xlu0 %v301, 16
        %v895 = vpop.permute.xlu0 %894
        %896 = vrot.lane.b32.xlu0 %v302, 16
        %v897 = vpop.permute.xlu0 %896
        %898 = vrot.lane.b32.xlu0 %v303, 16
        %v899 = vpop.permute.xlu0 %898
        %900 = vrot.lane.b32.xlu0 %v304, 16
        %v901 = vpop.permute.xlu0 %900
        %902 = vrot.lane.b32.xlu0 %v305, 16
        %v903 = vpop.permute.xlu0 %902
        %904 = vrot.lane.b32.xlu0 %v306, 16
        %v905 = vpop.permute.xlu0 %904
        %906 = vrot.lane.b32.xlu0 %v307, 16
        %v907 = vpop.permute.xlu0 %906
        %941 = vrot.lane.b32.xlu0 %v447, 20
        %v942 = vpop.permute.xlu0 %941
        %943 = vrot.lane.b32.xlu0 %v511, 20
        %v944 = vpop.permute.xlu0 %943
        %945 = vrot.lane.b32.xlu0 %v450, 20
        %v946 = vpop.permute.xlu0 %945
        %947 = vrot.lane.b32.xlu0 %v512, 20
        %v948 = vpop.permute.xlu0 %947
        %949 = vrot.lane.b32.xlu0 %v453, 20
        %v950 = vpop.permute.xlu0 %949
        %951 = vrot.lane.b32.xlu0 %v513, 20
        %v952 = vpop.permute.xlu0 %951
        %953 = vrot.lane.b32.xlu0 %v456, 20
        %v954 = vpop.permute.xlu0 %953
        %955 = vrot.lane.b32.xlu0 %v514, 20
        %v956 = vpop.permute.xlu0 %955
        %957 = vrot.lane.b32.xlu0 %v459, 20
        %v958 = vpop.permute.xlu0 %957
        %959 = vrot.lane.b32.xlu0 %v515, 20
        %v960 = vpop.permute.xlu0 %959
        %961 = vrot.lane.b32.xlu0 %v462, 20
        %v962 = vpop.permute.xlu0 %961
        %963 = vrot.lane.b32.xlu0 %v516, 20
        %v964 = vpop.permute.xlu0 %963
        %965 = vrot.lane.b32.xlu0 %v465, 20
        %v966 = vpop.permute.xlu0 %965
        %967 = vrot.lane.b32.xlu0 %v517, 20
        %v968 = vpop.permute.xlu0 %967
        %969 = vrot.lane.b32.xlu0 %v468, 20
        %v970 = vpop.permute.xlu0 %969
        %971 = vrot.lane.b32.xlu0 %v518, 20
        %v972 = vpop.permute.xlu0 %971
        %973 = vrot.lane.b32.xlu0 %v471, 20
        %v974 = vpop.permute.xlu0 %973
        %975 = vrot.lane.b32.xlu0 %v519, 20
        %v976 = vpop.permute.xlu0 %975
        %977 = vrot.lane.b32.xlu0 %v474, 20
        %v978 = vpop.permute.xlu0 %977
        %979 = vrot.lane.b32.xlu0 %v520, 20
        %v980 = vpop.permute.xlu0 %979
        %981 = vrot.lane.b32.xlu0 %v477, 20
        %v982 = vpop.permute.xlu0 %981
        %983 = vrot.lane.b32.xlu0 %v521, 20
        %v984 = vpop.permute.xlu0 %983
        %985 = vrot.lane.b32.xlu0 %v480, 20
        %v986 = vpop.permute.xlu0 %985
        %987 = vrot.lane.b32.xlu0 %v522, 20
        %v988 = vpop.permute.xlu0 %987
        %989 = vrot.lane.b32.xlu0 %v483, 20
        %v990 = vpop.permute.xlu0 %989
        %991 = vrot.lane.b32.xlu0 %v523, 20
        %v992 = vpop.permute.xlu0 %991
        %993 = vrot.lane.b32.xlu0 %v486, 20
        %v994 = vpop.permute.xlu0 %993
        %995 = vrot.lane.b32.xlu0 %v524, 20
        %v996 = vpop.permute.xlu0 %995
        %997 = vrot.lane.b32.xlu0 %v489, 20
        %v998 = vpop.permute.xlu0 %997
        %999 = vrot.lane.b32.xlu0 %v525, 20
        %v1000 = vpop.permute.xlu0 %999
        %1001 = vrot.lane.b32.xlu0 %v492, 20
        %v1002 = vpop.permute.xlu0 %1001
        %1003 = vrot.lane.b32.xlu0 %v526, 20
        %v1004 = vpop.permute.xlu0 %1003
        %1038 = vrot.lane.b32.xlu0 %v427, 24
        %v1039 = vpop.permute.xlu0 %1038
        %1040 = vrot.lane.b32.xlu0 %v349, 24
        %v1041 = vpop.permute.xlu0 %1040
        %1042 = vrot.lane.b32.xlu0 %v428, 24
        %v1043 = vpop.permute.xlu0 %1042
        %1044 = vrot.lane.b32.xlu0 %v352, 24
        %v1045 = vpop.permute.xlu0 %1044
        %1046 = vrot.lane.b32.xlu0 %v429, 24
        %v1047 = vpop.permute.xlu0 %1046
        %1048 = vrot.lane.b32.xlu0 %v355, 24
        %v1049 = vpop.permute.xlu0 %1048
        %1050 = vrot.lane.b32.xlu0 %v430, 24
        %v1051 = vpop.permute.xlu0 %1050
        %1052 = vrot.lane.b32.xlu0 %v358, 24
        %v1053 = vpop.permute.xlu0 %1052
        %1054 = vrot.lane.b32.xlu0 %v431, 24
        %v1055 = vpop.permute.xlu0 %1054
        %1056 = vrot.lane.b32.xlu0 %v361, 24
        %v1057 = vpop.permute.xlu0 %1056
        %1058 = vrot.lane.b32.xlu0 %v432, 24
        %v1059 = vpop.permute.xlu0 %1058
        %1060 = vrot.lane.b32.xlu0 %v364, 24
        %v1061 = vpop.permute.xlu0 %1060
        %1062 = vrot.lane.b32.xlu0 %v433, 24
        %v1063 = vpop.permute.xlu0 %1062
        %1064 = vrot.lane.b32.xlu0 %v367, 24
        %v1065 = vpop.permute.xlu0 %1064
        %1066 = vrot.lane.b32.xlu0 %v434, 24
        %v1067 = vpop.permute.xlu0 %1066
        %1068 = vrot.lane.b32.xlu0 %v370, 24
        %v1069 = vpop.permute.xlu0 %1068
        %1070 = vrot.lane.b32.xlu0 %v435, 24
        %v1071 = vpop.permute.xlu0 %1070
        %1072 = vrot.lane.b32.xlu0 %v373, 24
        %v1073 = vpop.permute.xlu0 %1072
        %1074 = vrot.lane.b32.xlu0 %v436, 24
        %v1075 = vpop.permute.xlu0 %1074
        %1076 = vrot.lane.b32.xlu0 %v376, 24
        %v1077 = vpop.permute.xlu0 %1076
        %1078 = vrot.lane.b32.xlu0 %v437, 24
        %v1079 = vpop.permute.xlu0 %1078
        %1080 = vrot.lane.b32.xlu0 %v379, 24
        %v1081 = vpop.permute.xlu0 %1080
        %1082 = vrot.lane.b32.xlu0 %v438, 24
        %v1083 = vpop.permute.xlu0 %1082
        %1084 = vrot.lane.b32.xlu0 %v382, 24
        %v1085 = vpop.permute.xlu0 %1084
        %1086 = vrot.lane.b32.xlu0 %v439, 24
        %v1087 = vpop.permute.xlu0 %1086
        %1088 = vrot.lane.b32.xlu0 %v385, 24
        %v1089 = vpop.permute.xlu0 %1088
        %1090 = vrot.lane.b32.xlu0 %v440, 24
        %v1091 = vpop.permute.xlu0 %1090
        %1092 = vrot.lane.b32.xlu0 %v388, 24
        %v1093 = vpop.permute.xlu0 %1092
        %1094 = vrot.lane.b32.xlu0 %v441, 24
        %v1095 = vpop.permute.xlu0 %1094
        %1096 = vrot.lane.b32.xlu0 %v391, 24
        %v1097 = vpop.permute.xlu0 %1096
        %1098 = vrot.lane.b32.xlu0 %v425, 24
        %v1099 = vpop.permute.xlu0 %1098
        %1100 = vrot.lane.b32.xlu0 %v343, 24
        %v1101 = vpop.permute.xlu0 %1100
        %1134 = vrot.lane.b32.xlu0 %v278, 28
        %v1135 = vpop.permute.xlu0 %1134
        %1136 = vrot.lane.b32.xlu0 %v279, 28
        %v1137 = vpop.permute.xlu0 %1136
        %1138 = vrot.lane.b32.xlu0 %v280, 28
        %v1139 = vpop.permute.xlu0 %1138
        %1140 = vrot.lane.b32.xlu0 %v281, 28
        %v1141 = vpop.permute.xlu0 %1140
        %1142 = vrot.lane.b32.xlu0 %v282, 28
        %v1143 = vpop.permute.xlu0 %1142
        %1144 = vrot.lane.b32.xlu0 %v283, 28
        %v1145 = vpop.permute.xlu0 %1144
        %1146 = vrot.lane.b32.xlu0 %v284, 28
        %v1147 = vpop.permute.xlu0 %1146
        %1148 = vrot.lane.b32.xlu0 %v285, 28
        %v1149 = vpop.permute.xlu0 %1148
        %1150 = vrot.lane.b32.xlu0 %v286, 28
        %v1151 = vpop.permute.xlu0 %1150
        %1152 = vrot.lane.b32.xlu0 %v287, 28
        %v1153 = vpop.permute.xlu0 %1152
        %1154 = vrot.lane.b32.xlu0 %v288, 28
        %v1155 = vpop.permute.xlu0 %1154
        %1156 = vrot.lane.b32.xlu0 %v289, 28
        %v1157 = vpop.permute.xlu0 %1156
        %1158 = vrot.lane.b32.xlu0 %v290, 28
        %v1159 = vpop.permute.xlu0 %1158
        %1160 = vrot.lane.b32.xlu0 %v291, 28
        %v1161 = vpop.permute.xlu0 %1160
        %1162 = vrot.lane.b32.xlu0 %v292, 28
        %v1163 = vpop.permute.xlu0 %1162
        %1164 = vrot.lane.b32.xlu0 %v293, 28
        %v1165 = vpop.permute.xlu0 %1164
        %1166 = vrot.lane.b32.xlu0 %v294, 28
        %v1167 = vpop.permute.xlu0 %1166
        %1168 = vrot.lane.b32.xlu0 %v295, 28
        %v1169 = vpop.permute.xlu0 %1168
        %1170 = vrot.lane.b32.xlu0 %v296, 28
        %v1171 = vpop.permute.xlu0 %1170
        %1172 = vrot.lane.b32.xlu0 %v297, 28
        %v1173 = vpop.permute.xlu0 %1172
        %1174 = vrot.lane.b32.xlu0 %v298, 28
        %v1175 = vpop.permute.xlu0 %1174
        %1176 = vrot.lane.b32.xlu0 %v299, 28
        %v1177 = vpop.permute.xlu0 %1176
        %1178 = vrot.lane.b32.xlu0 %v300, 28
        %v1179 = vpop.permute.xlu0 %1178
        %1180 = vrot.lane.b32.xlu0 %v301, 28
        %v1181 = vpop.permute.xlu0 %1180
        %1182 = vrot.lane.b32.xlu0 %v302, 28
        %v1183 = vpop.permute.xlu0 %1182
        %1184 = vrot.lane.b32.xlu0 %v303, 28
        %v1185 = vpop.permute.xlu0 %1184
        %1186 = vrot.lane.b32.xlu0 %v304, 28
        %v1187 = vpop.permute.xlu0 %1186
        %1188 = vrot.lane.b32.xlu0 %v305, 28
        %v1189 = vpop.permute.xlu0 %1188
        %1190 = vrot.lane.b32.xlu0 %v306, 28
        %v1191 = vpop.permute.xlu0 %1190
        %1192 = vrot.lane.b32.xlu0 %v307, 28
        %v1193 = vpop.permute.xlu0 %1192
        %1194 = vrot.lane.b32.xlu0 0.0, 28
        %v1195 = vpop.permute.xlu0 %1194
        %1227 = vrot.lane.b32.xlu0 %v450, 32
        %v1228 = vpop.permute.xlu0 %1227
        %1229 = vrot.lane.b32.xlu0 %v512, 32
        %v1230 = vpop.permute.xlu0 %1229
        %1231 = vrot.lane.b32.xlu0 %v453, 32
        %v1232 = vpop.permute.xlu0 %1231
        %1233 = vrot.lane.b32.xlu0 %v513, 32
        %v1234 = vpop.permute.xlu0 %1233
        %1235 = vrot.lane.b32.xlu0 %v456, 32
        %v1236 = vpop.permute.xlu0 %1235
        %1237 = vrot.lane.b32.xlu0 %v514, 32
        %v1238 = vpop.permute.xlu0 %1237
        %1239 = vrot.lane.b32.xlu0 %v459, 32
        %v1240 = vpop.permute.xlu0 %1239
        %1241 = vrot.lane.b32.xlu0 %v515, 32
        %v1242 = vpop.permute.xlu0 %1241
        %1243 = vrot.lane.b32.xlu0 %v462, 32
        %v1244 = vpop.permute.xlu0 %1243
        %1245 = vrot.lane.b32.xlu0 %v516, 32
        %v1246 = vpop.permute.xlu0 %1245
        %1247 = vrot.lane.b32.xlu0 %v465, 32
        %v1248 = vpop.permute.xlu0 %1247
        %1249 = vrot.lane.b32.xlu0 %v517, 32
        %v1250 = vpop.permute.xlu0 %1249
        %1251 = vrot.lane.b32.xlu0 %v468, 32
        %v1252 = vpop.permute.xlu0 %1251
        %1253 = vrot.lane.b32.xlu0 %v518, 32
        %v1254 = vpop.permute.xlu0 %1253
        %1255 = vrot.lane.b32.xlu0 %v471, 32
        %v1256 = vpop.permute.xlu0 %1255
        %1257 = vrot.lane.b32.xlu0 %v519, 32
        %v1258 = vpop.permute.xlu0 %1257
        %1259 = vrot.lane.b32.xlu0 %v474, 32
        %v1260 = vpop.permute.xlu0 %1259
        %1261 = vrot.lane.b32.xlu0 %v520, 32
        %v1262 = vpop.permute.xlu0 %1261
        %1263 = vrot.lane.b32.xlu0 %v477, 32
        %v1264 = vpop.permute.xlu0 %1263
        %1265 = vrot.lane.b32.xlu0 %v521, 32
        %v1266 = vpop.permute.xlu0 %1265
        %1267 = vrot.lane.b32.xlu0 %v480, 32
        %v1268 = vpop.permute.xlu0 %1267
        %1269 = vrot.lane.b32.xlu0 %v522, 32
        %v1270 = vpop.permute.xlu0 %1269
        %1271 = vrot.lane.b32.xlu0 %v483, 32
        %v1272 = vpop.permute.xlu0 %1271
        %1273 = vrot.lane.b32.xlu0 %v523, 32
        %v1274 = vpop.permute.xlu0 %1273
        %1275 = vrot.lane.b32.xlu0 %v486, 32
        %v1276 = vpop.permute.xlu0 %1275
        %1277 = vrot.lane.b32.xlu0 %v524, 32
        %v1278 = vpop.permute.xlu0 %1277
        %1279 = vrot.lane.b32.xlu0 %v489, 32
        %v1280 = vpop.permute.xlu0 %1279
        %1281 = vrot.lane.b32.xlu0 %v525, 32
        %v1282 = vpop.permute.xlu0 %1281
        %1283 = vrot.lane.b32.xlu0 %v492, 32
        %v1284 = vpop.permute.xlu0 %1283
        %1285 = vrot.lane.b32.xlu0 %v526, 32
        %v1286 = vpop.permute.xlu0 %1285
        %1287 = vrot.lane.b32.xlu0 %v444, 32
        %v1288 = vpop.permute.xlu0 %1287
        %1289 = vrot.lane.b32.xlu0 %v510, 32
        %v1290 = vpop.permute.xlu0 %1289
        %vm1323 = vcmask 31744
        %v1324 = vsel %vm1323, %v425, %v528
        %v1325 = vsel %vm1323, %v343, %v528
        %v1326 = vsel %vm1323, %v426, %v530
        %v1327 = vsel %vm1323, %v346, %v532
        %v1328 = vsel %vm1323, %v427, %v534
        %v1329 = vsel %vm1323, %v349, %v536
        %v1330 = vsel %vm1323, %v428, %v538
        %v1331 = vsel %vm1323, %v352, %v540
        %v1332 = vsel %vm1323, %v429, %v542
        %v1333 = vsel %vm1323, %v355, %v544
        %v1334 = vsel %vm1323, %v430, %v546
        %v1335 = vsel %vm1323, %v358, %v548
        %v1336 = vsel %vm1323, %v431, %v550
        %v1337 = vsel %vm1323, %v361, %v552
        %v1338 = vsel %vm1323, %v432, %v554
        %v1339 = vsel %vm1323, %v364, %v556
        %v1340 = vsel %vm1323, %v433, %v558
        %v1341 = vsel %vm1323, %v367, %v560
        %v1342 = vsel %vm1323, %v434, %v562
        %v1343 = vsel %vm1323, %v370, %v564
        %v1344 = vsel %vm1323, %v435, %v566
        %v1345 = vsel %vm1323, %v373, %v568
        %v1346 = vsel %vm1323, %v436, %v570
        %v1347 = vsel %vm1323, %v376, %v572
        %v1348 = vsel %vm1323, %v437, %v574
        %v1349 = vsel %vm1323, %v379, %v576
        %v1350 = vsel %vm1323, %v438, %v578
        %v1351 = vsel %vm1323, %v382, %v580
        %v1352 = vsel %vm1323, %v439, %v582
        %v1353 = vsel %vm1323, %v385, %v584
        %v1354 = vsel %vm1323, %v440, %v586
        %v1355 = vsel %vm1323, %v388, %v588
        %vm1356 = vcmask 64512
        %v1357 = vsel %vm1356, %v1324, %v637
        %v1358 = vsel %vm1356, %v1325, %v639
        %v1359 = vsel %vm1356, %v1326, %v641
        %v1360 = vsel %vm1356, %v1327, %v643
        %v1361 = vsel %vm1356, %v1328, %v645
        %v1362 = vsel %vm1356, %v1329, %v647
        %v1363 = vsel %vm1356, %v1330, %v649
        %v1364 = vsel %vm1356, %v1331, %v651
        %v1365 = vsel %vm1356, %v1332, %v653
        %v1366 = vsel %vm1356, %v1333, %v655
        %v1367 = vsel %vm1356, %v1334, %v657
        %v1368 = vsel %vm1356, %v1335, %v659
        %v1369 = vsel %vm1356, %v1336, %v661
        %v1370 = vsel %vm1356, %v1337, %v663
        %v1371 = vsel %vm1356, %v1338, %v665
        %v1372 = vsel %vm1356, %v1339, %v667
        %v1373 = vsel %vm1356, %v1340, %v669
        %v1374 = vsel %vm1356, %v1341, %v671
        %v1375 = vsel %vm1356, %v1342, %v673
        %v1376 = vsel %vm1356, %v1343, %v675
        %v1377 = vsel %vm1356, %v1344, %v677
        %v1378 = vsel %vm1356, %v1345, %v679
        %v1379 = vsel %vm1356, %v1346, %v681
        %v1380 = vsel %vm1356, %v1347, %v683
        %v1381 = vsel %vm1356, %v1348, %v685
        %v1382 = vsel %vm1356, %v1349, %v687
        %v1383 = vsel %vm1356, %v1350, %v689
        %v1384 = vsel %vm1356, %v1351, %v691
        %v1385 = vsel %vm1356, %v1352, %v693
        %v1386 = vsel %vm1356, %v1353, %v695
        %v1387 = vsel %vm1356, %v1354, %v697
        %v1388 = vsel %vm1356, %v1355, %v699
        %vm1389 = vcmask 97280
        %v1390 = vsel %vm1389, %v1357, %v749
        %v1391 = vsel %vm1389, %v1358, %v751
        %v1392 = vsel %vm1389, %v1359, %v753
        %v1393 = vsel %vm1389, %v1360, %v755
        %v1394 = vsel %vm1389, %v1361, %v757
        %v1395 = vsel %vm1389, %v1362, %v759
        %v1396 = vsel %vm1389, %v1363, %v761
        %v1397 = vsel %vm1389, %v1364, %v763
        %v1398 = vsel %vm1389, %v1365, %v765
        %v1399 = vsel %vm1389, %v1366, %v767
        %v1400 = vsel %vm1389, %v1367, %v769
        %v1401 = vsel %vm1389, %v1368, %v771
        %v1402 = vsel %vm1389, %v1369, %v773
        %v1403 = vsel %vm1389, %v1370, %v775
        %v1404 = vsel %vm1389, %v1371, %v777
        %v1405 = vsel %vm1389, %v1372, %v779
        %v1406 = vsel %vm1389, %v1373, %v781
        %v1407 = vsel %vm1389, %v1374, %v783
        %v1408 = vsel %vm1389, %v1375, %v785
        %v1409 = vsel %vm1389, %v1376, %v787
        %v1410 = vsel %vm1389, %v1377, %v789
        %v1411 = vsel %vm1389, %v1378, %v791
        %v1412 = vsel %vm1389, %v1379, %v793
        %v1413 = vsel %vm1389, %v1380, %v795
        %v1414 = vsel %vm1389, %v1381, %v797
        %v1415 = vsel %vm1389, %v1382, %v799
        %v1416 = vsel %vm1389, %v1383, %v801
        %v1417 = vsel %vm1389, %v1384, %v803
        %v1418 = vsel %vm1389, %v1385, %v805
        %v1419 = vsel %vm1389, %v1386, %v807
        %v1420 = vsel %vm1389, %v1387, %v809
        %v1421 = vsel %vm1389, %v1388, %v811
        %vm1422 = vcmask 130048
        %v1423 = vsel %vm1422, %v1390, %v845
        %v1424 = vsel %vm1422, %v1391, %v847
        %v1425 = vsel %vm1422, %v1392, %v849
        %v1426 = vsel %vm1422, %v1393, %v851
        %v1427 = vsel %vm1422, %v1394, %v853
        %v1428 = vsel %vm1422, %v1395, %v855
        %v1429 = vsel %vm1422, %v1396, %v857
        %v1430 = vsel %vm1422, %v1397, %v859
        %v1431 = vsel %vm1422, %v1398, %v861
        %v1432 = vsel %vm1422, %v1399, %v863
        %v1433 = vsel %vm1422, %v1400, %v865
        %v1434 = vsel %vm1422, %v1401, %v867
        %v1435 = vsel %vm1422, %v1402, %v869
        %v1436 = vsel %vm1422, %v1403, %v871
        %v1437 = vsel %vm1422, %v1404, %v873
        %v1438 = vsel %vm1422, %v1405, %v875
        %v1439 = vsel %vm1422, %v1406, %v877
        %v1440 = vsel %vm1422, %v1407, %v879
        %v1441 = vsel %vm1422, %v1408, %v881
        %v1442 = vsel %vm1422, %v1409, %v883
        %v1443 = vsel %vm1422, %v1410, %v885
        %v1444 = vsel %vm1422, %v1411, %v887
        %v1445 = vsel %vm1422, %v1412, %v889
        %v1446 = vsel %vm1422, %v1413, %v891
        %v1447 = vsel %vm1422, %v1414, %v893
        %v1448 = vsel %vm1422, %v1415, %v895
        %v1449 = vsel %vm1422, %v1416, %v897
        %v1450 = vsel %vm1422, %v1417, %v899
        %v1451 = vsel %vm1422, %v1418, %v901
        %v1452 = vsel %vm1422, %v1419, %v903
        %v1453 = vsel %vm1422, %v1420, %v905
        %v1454 = vsel %vm1422, %v1421, %v907
        %vm1455 = vcmask 162816
        %v1456 = vsel %vm1455, %v1423, %v942
        %v1457 = vsel %vm1455, %v1424, %v944
        %v1458 = vsel %vm1455, %v1425, %v946
        %v1459 = vsel %vm1455, %v1426, %v948
        %v1460 = vsel %vm1455, %v1427, %v950
        %v1461 = vsel %vm1455, %v1428, %v952
        %v1462 = vsel %vm1455, %v1429, %v954
        %v1463 = vsel %vm1455, %v1430, %v956
        %v1464 = vsel %vm1455, %v1431, %v958
        %v1465 = vsel %vm1455, %v1432, %v960
        %v1466 = vsel %vm1455, %v1433, %v962
        %v1467 = vsel %vm1455, %v1434, %v964
        %v1468 = vsel %vm1455, %v1435, %v966
        %v1469 = vsel %vm1455, %v1436, %v968
        %v1470 = vsel %vm1455, %v1437, %v970
        %v1471 = vsel %vm1455, %v1438, %v972
        %v1472 = vsel %vm1455, %v1439, %v974
        %v1473 = vsel %vm1455, %v1440, %v976
        %v1474 = vsel %vm1455, %v1441, %v978
        %v1475 = vsel %vm1455, %v1442, %v980
        %v1476 = vsel %vm1455, %v1443, %v982
        %v1477 = vsel %vm1455, %v1444, %v984
        %v1478 = vsel %vm1455, %v1445, %v986
        %v1479 = vsel %vm1455, %v1446, %v988
        %v1480 = vsel %vm1455, %v1447, %v990
        %v1481 = vsel %vm1455, %v1448, %v992
        %v1482 = vsel %vm1455, %v1449, %v994
        %v1483 = vsel %vm1455, %v1450, %v996
        %v1484 = vsel %vm1455, %v1451, %v998
        %v1485 = vsel %vm1455, %v1452, %v1000
        %v1486 = vsel %vm1455, %v1453, %v1002
        %v1487 = vsel %vm1455, %v1454, %v1004
        %vm1488 = vcmask 195584
        %v1489 = vsel %vm1488, %v1456, %v1039
        %v1490 = vsel %vm1488, %v1457, %v1041
        %v1491 = vsel %vm1488, %v1458, %v1043
        %v1492 = vsel %vm1488, %v1459, %v1045
        %v1493 = vsel %vm1488, %v1460, %v1047
        %v1494 = vsel %vm1488, %v1461, %v1049
        %v1495 = vsel %vm1488, %v1462, %v1051
        %v1496 = vsel %vm1488, %v1463, %v1053
        %v1497 = vsel %vm1488, %v1464, %v1055
        %v1498 = vsel %vm1488, %v1465, %v1057
        %v1499 = vsel %vm1488, %v1466, %v1059
        %v1500 = vsel %vm1488, %v1467, %v1061
        %v1501 = vsel %vm1488, %v1468, %v1063
        %v1502 = vsel %vm1488, %v1469, %v1065
        %v1503 = vsel %vm1488, %v1470, %v1067
        %v1504 = vsel %vm1488, %v1471, %v1069
        %v1505 = vsel %vm1488, %v1472, %v1071
        %v1506 = vsel %vm1488, %v1473, %v1073
        %v1507 = vsel %vm1488, %v1474, %v1075
        %v1508 = vsel %vm1488, %v1475, %v1077
        %v1509 = vsel %vm1488, %v1476, %v1079
        %v1510 = vsel %vm1488, %v1477, %v1081
        %v1511 = vsel %vm1488, %v1478, %v1083
        %v1512 = vsel %vm1488, %v1479, %v1085
        %v1513 = vsel %vm1488, %v1480, %v1087
        %v1514 = vsel %vm1488, %v1481, %v1089
        %v1515 = vsel %vm1488, %v1482, %v1091
        %v1516 = vsel %vm1488, %v1483, %v1093
        %v1517 = vsel %vm1488, %v1484, %v1095
        %v1518 = vsel %vm1488, %v1485, %v1097
        %v1519 = vsel %vm1488, %v1486, %v1099
        %v1520 = vsel %vm1488, %v1487, %v1101
        %vm1521 = vcmask 228352
        %v1522 = vsel %vm1521, %v1489, %v1135
        %v1523 = vsel %vm1521, %v1490, %v1137
        %v1524 = vsel %vm1521, %v1491, %v1139
        %v1525 = vsel %vm1521, %v1492, %v1141
        %v1526 = vsel %vm1521, %v1493, %v1143
        %v1527 = vsel %vm1521, %v1494, %v1145
        %v1528 = vsel %vm1521, %v1495, %v1147
        %v1529 = vsel %vm1521, %v1496, %v1149
        %v1530 = vsel %vm1521, %v1497, %v1151
        %v1531 = vsel %vm1521, %v1498, %v1153
        %v1532 = vsel %vm1521, %v1499, %v1155
        %v1533 = vsel %vm1521, %v1500, %v1157
        %v1534 = vsel %vm1521, %v1501, %v1159
        %v1535 = vsel %vm1521, %v1502, %v1161
        %v1536 = vsel %vm1521, %v1503, %v1163
        %v1537 = vsel %vm1521, %v1504, %v1165
        %v1538 = vsel %vm1521, %v1505, %v1167
        %v1539 = vsel %vm1521, %v1506, %v1169
        %v1540 = vsel %vm1521, %v1507, %v1171
        %v1541 = vsel %vm1521, %v1508, %v1173
        %v1542 = vsel %vm1521, %v1509, %v1175
        %v1543 = vsel %vm1521, %v1510, %v1177
        %v1544 = vsel %vm1521, %v1511, %v1179
        %v1545 = vsel %vm1521, %v1512, %v1181
        %v1546 = vsel %vm1521, %v1513, %v1183
        %v1547 = vsel %vm1521, %v1514, %v1185
        %v1548 = vsel %vm1521, %v1515, %v1187
        %v1549 = vsel %vm1521, %v1516, %v1189
        %v1550 = vsel %vm1521, %v1517, %v1191
        %v1551 = vsel %vm1521, %v1518, %v1193
        %v1552 = vsel %vm1521, %v1519, %v1195
        %v1553 = vsel %vm1521, %v1520, %v1195
        %vm1554 = vcmask 261120
        %v1555 = vsel %vm1554, %v1522, %v1228
        %v1556 = vsel %vm1554, %v1523, %v1230
        %v1557 = vsel %vm1554, %v1524, %v1232
        %v1558 = vsel %vm1554, %v1525, %v1234
        %v1559 = vsel %vm1554, %v1526, %v1236
        %v1560 = vsel %vm1554, %v1527, %v1238
        %v1561 = vsel %vm1554, %v1528, %v1240
        %v1562 = vsel %vm1554, %v1529, %v1242
        %v1563 = vsel %vm1554, %v1530, %v1244
        %v1564 = vsel %vm1554, %v1531, %v1246
        %v1565 = vsel %vm1554, %v1532, %v1248
        %v1566 = vsel %vm1554, %v1533, %v1250
        %v1567 = vsel %vm1554, %v1534, %v1252
        %v1568 = vsel %vm1554, %v1535, %v1254
        %v1569 = vsel %vm1554, %v1536, %v1256
        %v1570 = vsel %vm1554, %v1537, %v1258
        %v1571 = vsel %vm1554, %v1538, %v1260
        %v1572 = vsel %vm1554, %v1539, %v1262
        %v1573 = vsel %vm1554, %v1540, %v1264
        %v1574 = vsel %vm1554, %v1541, %v1266
        %v1575 = vsel %vm1554, %v1542, %v1268
        %v1576 = vsel %vm1554, %v1543, %v1270
        %v1577 = vsel %vm1554, %v1544, %v1272
        %v1578 = vsel %vm1554, %v1545, %v1274
        %v1579 = vsel %vm1554, %v1546, %v1276
        %v1580 = vsel %vm1554, %v1547, %v1278
        %v1581 = vsel %vm1554, %v1548, %v1280
        %v1582 = vsel %vm1554, %v1549, %v1282
        %v1583 = vsel %vm1554, %v1550, %v1284
        %v1584 = vsel %vm1554, %v1551, %v1286
        %v1585 = vsel %vm1554, %v1552, %v1288
        %v1586 = vsel %vm1554, %v1553, %v1290
        %v1587 = vld [vmem:[%s1] sm:$0xff]
        %v1588 = vld [vmem:[%s1 + $0x8] sm:$0xff]
        %v1589 = vld [vmem:[%s1 + $0x10] sm:$0xff]
        %v1590 = vld [vmem:[%s1 + $0x18] sm:$0xff]
        %v1591 = vld [vmem:[%s1 + $0x20] sm:$0xf]
        %v1592 = vld [vmem:[%s2] sm:$0x1]
        %v1594 = vlaneseq
        %v1595 = vshrl.u32 %v1594, 7
        %v1596 = vsub.s32 0, %v1595
        %v1597 = vrot.slane %v1592, %v1596
        %vm1599 = vcmask 293888
        %v1601 = vsel %vm1599, %v1555, 0
        %v1604 = vsel %vm1599, %v1556, 0
        %v1607 = vsel %vm1599, %v1557, 0
        %v1610 = vsel %vm1599, %v1558, 0
        %v1613 = vsel %vm1599, %v1559, 0
        %v1616 = vsel %vm1599, %v1560, 0
        %v1619 = vsel %vm1599, %v1561, 0
        %v1622 = vsel %vm1599, %v1562, 0
        %v1625 = vsel %vm1599, %v1563, 0
        %v1628 = vsel %vm1599, %v1564, 0
        %v1631 = vsel %vm1599, %v1565, 0
        %v1634 = vsel %vm1599, %v1566, 0
        %v1637 = vsel %vm1599, %v1567, 0
        %v1640 = vsel %vm1599, %v1568, 0
        %v1643 = vsel %vm1599, %v1569, 0
        %v1646 = vsel %vm1599, %v1570, 0
        %v1649 = vsel %vm1599, %v1571, 0
        %v1652 = vsel %vm1599, %v1572, 0
        %v1655 = vsel %vm1599, %v1573, 0
        %v1658 = vsel %vm1599, %v1574, 0
        %v1661 = vsel %vm1599, %v1575, 0
        %v1664 = vsel %vm1599, %v1576, 0
        %v1667 = vsel %vm1599, %v1577, 0
        %v1670 = vsel %vm1599, %v1578, 0
        %v1673 = vsel %vm1599, %v1579, 0
        %v1676 = vsel %vm1599, %v1580, 0
        %v1679 = vsel %vm1599, %v1581, 0
        %v1682 = vsel %vm1599, %v1582, 0
        %v1685 = vsel %vm1599, %v1583, 0
        %v1688 = vsel %vm1599, %v1584, 0
        %v1691 = vsel %vm1599, %v1585, 0
        %v1694 = vsel %vm1599, %v1586, 0
        %vm1696 = vcmask 1043456
        %v1698 = vsel %vm1696, %v1591, 0
        %1700 = vmatprep.subr.mxu0 0.0
        %1701 = vmatpush1.msra.mxu0 %v1587
        %1702 = vmatprep.subr.mxu0 0.0
        %1703 = vmatpush1.msra.mxu0 %v1588
        %1704 = vmatprep.subr.mxu0 0.0
        %1705 = vmatpush1.msra.mxu0 %v1589
        %1706 = vmatprep.subr.mxu0 0.0
        %1707 = vmatpush1.msra.mxu0 %v1590
        %1708 = vmatprep.subr.mxu0 0.0
        %1709 = vmatpush1.msra.mxu0 %v1698
        %1710 = vmatprep.subr.mxu0 0.0
        %1711 = vmatpush1.msra.mxu0 0.0
        %1712 = vmatprep.subr.mxu0 0.0
        %1713 = vmatpush1.msra.mxu0 0.0
        %1714 = vmatprep.subr.mxu0 0.0
        %1715 = vmatpush1.msra.mxu0 0.0
        %1716 = vmatprep.subr.mxu0 0.0
        %1717 = vmatpush1.msra.mxu0 0.0
        %1718 = vmatprep.subr.mxu0 0.0
        %1719 = vmatpush1.msra.mxu0 0.0
        %1720 = vmatprep.subr.mxu0 0.0
        %1721 = vmatpush1.msra.mxu0 0.0
        %1722 = vmatprep.subr.mxu0 0.0
        %1723 = vmatpush1.msra.mxu0 0.0
        %1724 = vmatprep.subr.mxu0 0.0
        %1725 = vmatpush1.msra.mxu0 0.0
        %1726 = vmatprep.subr.mxu0 0.0
        %1727 = vmatpush1.msra.mxu0 0.0
        %1728 = vmatprep.subr.mxu0 0.0
        %1729 = vmatpush1.msra.mxu0 0.0
        %1730 = vmatprep.subr.mxu0 0.0
        %1731 = vmatpush1.msra.mxu0 0.0
        %1732 = vmatprep.subr.mxu0 0.0
        %1733 = vmatpush1.msra.mxu0 0.0
        %1734 = vmatprep.subr.mxu0 0.0
        %1735 = vmatpush1.msra.mxu0 0.0
        %1736 = vmatprep.subr.mxu0 0.0
        %1737 = vmatpush1.msra.mxu0 0.0
        %1738 = vmatprep.subr.mxu0 0.0
        %1739 = vmatpush1.msra.mxu0 0.0
        %1740 = vmatprep.subr.mxu0 0.0
        %1741 = vmatpush1.msra.mxu0 0.0
        %1742 = vmatprep.subr.mxu0 0.0
        %1743 = vmatpush1.msra.mxu0 0.0
        %1744 = vmatprep.subr.mxu0 0.0
        %1745 = vmatpush1.msra.mxu0 0.0
        %1746 = vmatprep.subr.mxu0 0.0
        %1747 = vmatpush1.msra.mxu0 0.0
        %1748 = vmatprep.subr.mxu0 0.0
        %1749 = vmatpush1.msra.mxu0 0.0
        %1750 = vmatprep.subr.mxu0 0.0
        %1751 = vmatpush1.msra.mxu0 0.0
        %1752 = vmatprep.subr.mxu0 0.0
        %1753 = vmatpush1.msra.mxu0 0.0
        %1754 = vmatprep.subr.mxu0 0.0
        %1755 = vmatpush1.msra.mxu0 0.0
        %1756 = vmatprep.subr.mxu0 0.0
        %1757 = vmatpush1.msra.mxu0 0.0
        %1758 = vmatprep.subr.mxu0 0.0
        %1759 = vmatpush1.msra.mxu0 0.0
        %1760 = vmatprep.subr.mxu0 0.0
        %1761 = vmatpush1.msra.mxu0 0.0
        %1762 = vmatprep.subr.mxu0 0.0
        %1763 = vmatpush1.msra.mxu0 0.0
        %1764 = vmatprep.mubr.f32.mxu0 0.0
        %1765 = vmatmul.mubr.f32.gmra.mrb[0].mxu0 %v1601
        %v1766 = vpop.f32.mrb[0].mxu0
        %v1767 = vadd.f32 %v1597, %v1766
        %v1768 = vpop.f32.mrb[0].mxu0
        %1769 = vmatprep.mubr.f32.mxu0 0.0
        %1770 = vmatmul.mubr.f32.gmra.mrb[0].mxu0 %v1604
        %v1771 = vpop.f32.mrb[0].mxu0
        %v1772 = vadd.f32 %v1597, %v1771
        %v1773 = vpop.f32.mrb[0].mxu0
        %1774 = vmatprep.mubr.f32.mxu0 0.0
        %1775 = vmatmul.mubr.f32.gmra.mrb[0].mxu0 %v1607
        %v1776 = vpop.f32.mrb[0].mxu0
        %v1777 = vadd.f32 %v1597, %v1776
        %v1778 = vpop.f32.mrb[0].mxu0
        %1779 = vmatprep.mubr.f32.mxu0 0.0
        %1780 = vmatmul.mubr.f32.gmra.mrb[0].mxu0 %v1610
        %v1781 = vpop.f32.mrb[0].mxu0
        %v1782 = vadd.f32 %v1597, %v1781
        %v1783 = vpop.f32.mrb[0].mxu0
        %1784 = vmatprep.mubr.f32.mxu0 0.0
        %1785 = vmatmul.mubr.f32.gmra.mrb[0].mxu0 %v1613
        %v1786 = vpop.f32.mrb[0].mxu0
        %v1787 = vadd.f32 %v1597, %v1786
        %v1788 = vpop.f32.mrb[0].mxu0
        %1789 = vmatprep.mubr.f32.mxu0 0.0
        %1790 = vmatmul.mubr.f32.gmra.mrb[0].mxu0 %v1616
        %v1791 = vpop.f32.mrb[0].mxu0
        %v1792 = vadd.f32 %v1597, %v1791
        %v1793 = vpop.f32.mrb[0].mxu0
        %1794 = vmatprep.mubr.f32.mxu0 0.0
        %1795 = vmatmul.mubr.f32.gmra.mrb[0].mxu0 %v1619
        %v1796 = vpop.f32.mrb[0].mxu0
        %v1797 = vadd.f32 %v1597, %v1796
        %v1798 = vpop.f32.mrb[0].mxu0
        %1799 = vmatprep.mubr.f32.mxu0 0.0
        %1800 = vmatmul.mubr.f32.gmra.mrb[0].mxu0 %v1622
        %v1801 = vpop.f32.mrb[0].mxu0
        %v1802 = vadd.f32 %v1597, %v1801
        %v1803 = vpop.f32.mrb[0].mxu0
        %1804 = vmatprep.mubr.f32.mxu0 0.0
        %1805 = vmatmul.mubr.f32.gmra.mrb[0].mxu0 %v1625
        %v1806 = vpop.f32.mrb[0].mxu0
        %v1807 = vadd.f32 %v1597, %v1806
        %v1808 = vpop.f32.mrb[0].mxu0
        %1809 = vmatprep.mubr.f32.mxu0 0.0
        %1810 = vmatmul.mubr.f32.gmra.mrb[0].mxu0 %v1628
        %v1811 = vpop.f32.mrb[0].mxu0
        %v1812 = vadd.f32 %v1597, %v1811
        %v1813 = vpop.f32.mrb[0].mxu0
        %1814 = vmatprep.mubr.f32.mxu0 0.0
        %1815 = vmatmul.mubr.f32.gmra.mrb[0].mxu0 %v1631
        %v1816 = vpop.f32.mrb[0].mxu0
        %v1817 = vadd.f32 %v1597, %v1816
        %v1818 = vpop.f32.mrb[0].mxu0
        %1819 = vmatprep.mubr.f32.mxu0 0.0
        %1820 = vmatmul.mubr.f32.gmra.mrb[0].mxu0 %v1634
        %v1821 = vpop.f32.mrb[0].mxu0
        %v1822 = vadd.f32 %v1597, %v1821
        %v1823 = vpop.f32.mrb[0].mxu0
        %1824 = vmatprep.mubr.f32.mxu0 0.0
        %1825 = vmatmul.mubr.f32.gmra.mrb[0].mxu0 %v1637
        %v1826 = vpop.f32.mrb[0].mxu0
        %v1827 = vadd.f32 %v1597, %v1826
        %v1828 = vpop.f32.mrb[0].mxu0
        %1829 = vmatprep.mubr.f32.mxu0 0.0
        %1830 = vmatmul.mubr.f32.gmra.mrb[0].mxu0 %v1640
        %v1831 = vpop.f32.mrb[0].mxu0
        %v1832 = vadd.f32 %v1597, %v1831
        %v1833 = vpop.f32.mrb[0].mxu0
        %1834 = vmatprep.mubr.f32.mxu0 0.0
        %1835 = vmatmul.mubr.f32.gmra.mrb[0].mxu0 %v1643
        %v1836 = vpop.f32.mrb[0].mxu0
        %v1837 = vadd.f32 %v1597, %v1836
        %v1838 = vpop.f32.mrb[0].mxu0
        %1839 = vmatprep.mubr.f32.mxu0 0.0
        %1840 = vmatmul.mubr.f32.gmra.mrb[0].mxu0 %v1646
        %v1841 = vpop.f32.mrb[0].mxu0
        %v1842 = vadd.f32 %v1597, %v1841
        %v1843 = vpop.f32.mrb[0].mxu0
        %1844 = vmatprep.mubr.f32.mxu0 0.0
        %1845 = vmatmul.mubr.f32.gmra.mrb[0].mxu0 %v1649
        %v1846 = vpop.f32.mrb[0].mxu0
        %v1847 = vadd.f32 %v1597, %v1846
        %v1848 = vpop.f32.mrb[0].mxu0
        %1849 = vmatprep.mubr.f32.mxu0 0.0
        %1850 = vmatmul.mubr.f32.gmra.mrb[0].mxu0 %v1652
        %v1851 = vpop.f32.mrb[0].mxu0
        %v1852 = vadd.f32 %v1597, %v1851
        %v1853 = vpop.f32.mrb[0].mxu0
        %1854 = vmatprep.mubr.f32.mxu0 0.0
        %1855 = vmatmul.mubr.f32.gmra.mrb[0].mxu0 %v1655
        %v1856 = vpop.f32.mrb[0].mxu0
        %v1857 = vadd.f32 %v1597, %v1856
        %v1858 = vpop.f32.mrb[0].mxu0
        %1859 = vmatprep.mubr.f32.mxu0 0.0
        %1860 = vmatmul.mubr.f32.gmra.mrb[0].mxu0 %v1658
        %v1861 = vpop.f32.mrb[0].mxu0
        %v1862 = vadd.f32 %v1597, %v1861
        %v1863 = vpop.f32.mrb[0].mxu0
        %1864 = vmatprep.mubr.f32.mxu0 0.0
        %1865 = vmatmul.mubr.f32.gmra.mrb[0].mxu0 %v1661
        %v1866 = vpop.f32.mrb[0].mxu0
        %v1867 = vadd.f32 %v1597, %v1866
        %v1868 = vpop.f32.mrb[0].mxu0
        %1869 = vmatprep.mubr.f32.mxu0 0.0
        %1870 = vmatmul.mubr.f32.gmra.mrb[0].mxu0 %v1664
        %v1871 = vpop.f32.mrb[0].mxu0
        %v1872 = vadd.f32 %v1597, %v1871
        %v1873 = vpop.f32.mrb[0].mxu0
        %1874 = vmatprep.mubr.f32.mxu0 0.0
        %1875 = vmatmul.mubr.f32.gmra.mrb[0].mxu0 %v1667
        %v1876 = vpop.f32.mrb[0].mxu0
        %v1877 = vadd.f32 %v1597, %v1876
        %v1878 = vpop.f32.mrb[0].mxu0
        %1879 = vmatprep.mubr.f32.mxu0 0.0
        %1880 = vmatmul.mubr.f32.gmra.mrb[0].mxu0 %v1670
        %v1881 = vpop.f32.mrb[0].mxu0
        %v1882 = vadd.f32 %v1597, %v1881
        %v1883 = vpop.f32.mrb[0].mxu0
        %1884 = vmatprep.mubr.f32.mxu0 0.0
        %1885 = vmatmul.mubr.f32.gmra.mrb[0].mxu0 %v1673
        %v1886 = vpop.f32.mrb[0].mxu0
        %v1887 = vadd.f32 %v1597, %v1886
        %v1888 = vpop.f32.mrb[0].mxu0
        %1889 = vmatprep.mubr.f32.mxu0 0.0
        %1890 = vmatmul.mubr.f32.gmra.mrb[0].mxu0 %v1676
        %v1891 = vpop.f32.mrb[0].mxu0
        %v1892 = vadd.f32 %v1597, %v1891
        %v1893 = vpop.f32.mrb[0].mxu0
        %1894 = vmatprep.mubr.f32.mxu0 0.0
        %1895 = vmatmul.mubr.f32.gmra.mrb[0].mxu0 %v1679
        %v1896 = vpop.f32.mrb[0].mxu0
        %v1897 = vadd.f32 %v1597, %v1896
        %v1898 = vpop.f32.mrb[0].mxu0
        %1899 = vmatprep.mubr.f32.mxu0 0.0
        %1900 = vmatmul.mubr.f32.gmra.mrb[0].mxu0 %v1682
        %v1901 = vpop.f32.mrb[0].mxu0
        %v1902 = vadd.f32 %v1597, %v1901
        %v1903 = vpop.f32.mrb[0].mxu0
        %1904 = vmatprep.mubr.f32.mxu0 0.0
        %1905 = vmatmul.mubr.f32.gmra.mrb[0].mxu0 %v1685
        %v1906 = vpop.f32.mrb[0].mxu0
        %v1907 = vadd.f32 %v1597, %v1906
        %v1908 = vpop.f32.mrb[0].mxu0
        %1909 = vmatprep.mubr.f32.mxu0 0.0
        %1910 = vmatmul.mubr.f32.gmra.mrb[0].mxu0 %v1688
        %v1911 = vpop.f32.mrb[0].mxu0
        %v1912 = vadd.f32 %v1597, %v1911
        %v1913 = vpop.f32.mrb[0].mxu0
        %1914 = vmatprep.mubr.f32.mxu0 0.0
        %1915 = vmatmul.mubr.f32.gmra.mrb[0].mxu0 %v1691
        %v1916 = vpop.f32.mrb[0].mxu0
        %v1917 = vadd.f32 %v1597, %v1916
        %v1918 = vpop.f32.mrb[0].mxu0
        %1919 = vmatprep.mubr.f32.mxu0 0.0
        %1920 = vmatmul.mubr.f32.gmra.mrb[0].mxu0 %v1694
        %v1921 = vpop.f32.mrb[0].mxu0
        %v1922 = vadd.f32 %v1597, %v1921
        %v1923 = vpop.f32.mrb[0].mxu0
        %1924 = vdwg.mxu0
        %v1925 = vmax.f32 %v1767, 0.0
        %v1926 = vmax.f32 %v1772, 0.0
        %v1927 = vmax.f32 %v1777, 0.0
        %v1928 = vmax.f32 %v1782, 0.0
        %v1929 = vmax.f32 %v1787, 0.0
        %v1930 = vmax.f32 %v1792, 0.0
        %v1931 = vmax.f32 %v1797, 0.0
        %v1932 = vmax.f32 %v1802, 0.0
        %v1933 = vmax.f32 %v1807, 0.0
        %v1934 = vmax.f32 %v1812, 0.0
        %v1935 = vmax.f32 %v1817, 0.0
        %v1936 = vmax.f32 %v1822, 0.0
        %v1937 = vmax.f32 %v1827, 0.0
        %v1938 = vmax.f32 %v1832, 0.0
        %v1939 = vmax.f32 %v1837, 0.0
        %v1940 = vmax.f32 %v1842, 0.0
        %v1941 = vmax.f32 %v1847, 0.0
        %v1942 = vmax.f32 %v1852, 0.0
        %v1943 = vmax.f32 %v1857, 0.0
        %v1944 = vmax.f32 %v1862, 0.0
        %v1945 = vmax.f32 %v1867, 0.0
        %v1946 = vmax.f32 %v1872, 0.0
        %v1947 = vmax.f32 %v1877, 0.0
        %v1948 = vmax.f32 %v1882, 0.0
        %v1949 = vmax.f32 %v1887, 0.0
        %v1950 = vmax.f32 %v1892, 0.0
        %v1951 = vmax.f32 %v1897, 0.0
        %v1952 = vmax.f32 %v1902, 0.0
        %v1953 = vmax.f32 %v1907, 0.0
        %v1954 = vmax.f32 %v1912, 0.0
        %v1955 = vmax.f32 %v1917, 0.0
        %v1956 = vmax.f32 %v1922, 0.0
        %v1957 = vsel %vm1356, %v1925, 0.0
        %v1958 = vsel %vm1356, %v1926, 0.0
        %v1959 = vadd.f32 %v1957, %v1958
        %v1960 = vsel %vm1356, %v1927, 0.0
        %v1961 = vadd.f32 %v1959, %v1960
        %v1962 = vsel %vm1356, %v1928, 0.0
        %v1963 = vadd.f32 %v1961, %v1962
        %v1964 = vsel %vm1356, %v1929, 0.0
        %v1965 = vadd.f32 %v1963, %v1964
        %v1966 = vsel %vm1356, %v1930, 0.0
        %v1967 = vadd.f32 %v1965, %v1966
        %v1968 = vsel %vm1356, %v1931, 0.0
        %v1969 = vadd.f32 %v1967, %v1968
        %v1970 = vsel %vm1356, %v1932, 0.0
        %v1971 = vadd.f32 %v1969, %v1970
        %v1972 = vsel %vm1356, %v1933, 0.0
        %v1973 = vadd.f32 %v1971, %v1972
        %v1974 = vsel %vm1356, %v1934, 0.0
        %v1975 = vadd.f32 %v1973, %v1974
        %v1976 = vsel %vm1356, %v1935, 0.0
        %v1977 = vadd.f32 %v1975, %v1976
        %v1978 = vsel %vm1356, %v1936, 0.0
        %v1979 = vadd.f32 %v1977, %v1978
        %v1980 = vsel %vm1356, %v1937, 0.0
        %v1981 = vadd.f32 %v1979, %v1980
        %v1982 = vsel %vm1356, %v1938, 0.0
        %v1983 = vadd.f32 %v1981, %v1982
        %v1984 = vsel %vm1356, %v1939, 0.0
        %v1985 = vadd.f32 %v1983, %v1984
        %v1986 = vsel %vm1356, %v1940, 0.0
        %v1987 = vadd.f32 %v1985, %v1986
        %v1988 = vsel %vm1356, %v1941, 0.0
        %v1989 = vadd.f32 %v1987, %v1988
        %v1990 = vsel %vm1356, %v1942, 0.0
        %v1991 = vadd.f32 %v1989, %v1990
        %v1992 = vsel %vm1356, %v1943, 0.0
        %v1993 = vadd.f32 %v1991, %v1992
        %v1994 = vsel %vm1356, %v1944, 0.0
        %v1995 = vadd.f32 %v1993, %v1994
        %v1996 = vsel %vm1356, %v1945, 0.0
        %v1997 = vadd.f32 %v1995, %v1996
        %v1998 = vsel %vm1356, %v1946, 0.0
        %v1999 = vadd.f32 %v1997, %v1998
        %v2000 = vsel %vm1356, %v1947, 0.0
        %v2001 = vadd.f32 %v1999, %v2000
        %v2002 = vsel %vm1356, %v1948, 0.0
        %v2003 = vadd.f32 %v2001, %v2002
        %v2004 = vsel %vm1356, %v1949, 0.0
        %v2005 = vadd.f32 %v2003, %v2004
        %v2006 = vsel %vm1356, %v1950, 0.0
        %v2007 = vadd.f32 %v2005, %v2006
        %v2008 = vsel %vm1356, %v1951, 0.0
        %v2009 = vadd.f32 %v2007, %v2008
        %v2010 = vsel %vm1356, %v1952, 0.0
        %v2011 = vadd.f32 %v2009, %v2010
        %v2012 = vsel %vm1356, %v1953, 0.0
        %v2013 = vadd.f32 %v2011, %v2012
        %v2014 = vsel %vm1356, %v1954, 0.0
        %v2015 = vadd.f32 %v2013, %v2014
        %v2016 = vsel %vm1356, %v1955, 0.0
        %v2017 = vadd.f32 %v2015, %v2016
        %v2018 = vsel %vm1356, %v1956, 0.0
        %v2019 = vadd.f32 %v2017, %v2018
        %v2020 = vrot.slane %v2019, 4
        %v2021 = vadd.f32 %v2019, %v2020
        %v2022 = vrot.slane %v2021, 2
        %v2023 = vadd.f32 %v2021, %v2022
        %v2024 = vrot.slane %v2023, 1
        %v2025 = vadd.f32 %v2023, %v2024
        %v2026 = vmul.f32 %v2025, 0.00390625
        %v2027 = vld [vmem:[%s3] sm:$0xff]
        %v2028 = vld [vmem:[%s4] sm:$0x1]
        %v2030 = vsel %vm1356, %v2026, 0
        %2032 = vmatprep.subr.mxu0 0.0
        %2033 = vmatpush1.msra.mxu0 %v2027
        %2034 = vmatprep.subr.mxu0 0.0
        %2035 = vmatpush1.msra.mxu0 0.0
        %2036 = vmatprep.subr.mxu0 0.0
        %2037 = vmatpush1.msra.mxu0 0.0
        %2038 = vmatprep.subr.mxu0 0.0
        %2039 = vmatpush1.msra.mxu0 0.0
        %2040 = vmatprep.subr.mxu0 0.0
        %2041 = vmatpush1.msra.mxu0 0.0
        %2042 = vmatprep.subr.mxu0 0.0
        %2043 = vmatpush1.msra.mxu0 0.0
        %2044 = vmatprep.subr.mxu0 0.0
        %2045 = vmatpush1.msra.mxu0 0.0
        %2046 = vmatprep.subr.mxu0 0.0
        %2047 = vmatpush1.msra.mxu0 0.0
        %2048 = vmatprep.subr.mxu0 0.0
        %2049 = vmatpush1.msra.mxu0 0.0
        %2050 = vmatprep.subr.mxu0 0.0
        %2051 = vmatpush1.msra.mxu0 0.0
        %2052 = vmatprep.subr.mxu0 0.0
        %2053 = vmatpush1.msra.mxu0 0.0
        %2054 = vmatprep.subr.mxu0 0.0
        %2055 = vmatpush1.msra.mxu0 0.0
        %2056 = vmatprep.subr.mxu0 0.0
        %2057 = vmatpush1.msra.mxu0 0.0
        %2058 = vmatprep.subr.mxu0 0.0
        %2059 = vmatpush1.msra.mxu0 0.0
        %2060 = vmatprep.subr.mxu0 0.0
        %2061 = vmatpush1.msra.mxu0 0.0
        %2062 = vmatprep.subr.mxu0 0.0
        %2063 = vmatpush1.msra.mxu0 0.0
        %2064 = vmatprep.subr.mxu0 0.0
        %2065 = vmatpush1.msra.mxu0 0.0
        %2066 = vmatprep.subr.mxu0 0.0
        %2067 = vmatpush1.msra.mxu0 0.0
        %2068 = vmatprep.subr.mxu0 0.0
        %2069 = vmatpush1.msra.mxu0 0.0
        %2070 = vmatprep.subr.mxu0 0.0
        %2071 = vmatpush1.msra.mxu0 0.0
        %2072 = vmatprep.subr.mxu0 0.0
        %2073 = vmatpush1.msra.mxu0 0.0
        %2074 = vmatprep.subr.mxu0 0.0
        %2075 = vmatpush1.msra.mxu0 0.0
        %2076 = vmatprep.subr.mxu0 0.0
        %2077 = vmatpush1.msra.mxu0 0.0
        %2078 = vmatprep.subr.mxu0 0.0
        %2079 = vmatpush1.msra.mxu0 0.0
        %2080 = vmatprep.subr.mxu0 0.0
        %2081 = vmatpush1.msra.mxu0 0.0
        %2082 = vmatprep.subr.mxu0 0.0
        %2083 = vmatpush1.msra.mxu0 0.0
        %2084 = vmatprep.subr.mxu0 0.0
        %2085 = vmatpush1.msra.mxu0 0.0
        %2086 = vmatprep.subr.mxu0 0.0
        %2087 = vmatpush1.msra.mxu0 0.0
        %2088 = vmatprep.subr.mxu0 0.0
        %2089 = vmatpush1.msra.mxu0 0.0
        %2090 = vmatprep.subr.mxu0 0.0
        %2091 = vmatpush1.msra.mxu0 0.0
        %2092 = vmatprep.subr.mxu0 0.0
        %2093 = vmatpush1.msra.mxu0 0.0
        %2094 = vmatprep.subr.mxu0 0.0
        %2095 = vmatpush1.msra.mxu0 0.0
        %2096 = vmatprep.mubr.f32.mxu0 0.0
        %2097 = vmatmul.mubr.f32.gmra.mrb[0].mxu0 %v2030
        %v2098 = vpop.f32.mrb[0].mxu0
        %v2099 = vadd.f32 %v2028, %v2098
        %v2100 = vpop.f32.mrb[0].mxu0
        %2101 = vdwg.mxu0
        %v2102 = vsub.f32 0.0, %v2099
        %v2103 = vmul.f32 %v2102, 1.442695
        %v2104 = vpow.pop %v2103
        %v2105 = vadd.f32 %v2104, 1.0
        %v2106 = vrcp.pop %v2105
        %v2107 = vmul.f32 1.0, %v2106
        %v2108 = vld [vmem:[%s5] sm:$0xff]
        %v2109 = vld [vmem:[%s5 + $0x8] sm:$0xff]
        %v2110 = vld [vmem:[%s6] sm:$0x1]
        %v2112 = vsel %vm1422, %v2107, 0
        %2114 = vmatprep.subr.mxu0 0.0
        %2115 = vmatpush1.msra.mxu0 %v2108
        %2116 = vmatprep.subr.mxu0 0.0
        %2117 = vmatpush1.msra.mxu0 %v2109
        %2118 = vmatprep.subr.mxu0 0.0
        %2119 = vmatpush1.msra.mxu0 0.0
        %2120 = vmatprep.subr.mxu0 0.0
        %2121 = vmatpush1.msra.mxu0 0.0
        %2122 = vmatprep.subr.mxu0 0.0
        %2123 = vmatpush1.msra.mxu0 0.0
        %2124 = vmatprep.subr.mxu0 0.0
        %2125 = vmatpush1.msra.mxu0 0.0
        %2126 = vmatprep.subr.mxu0 0.0
        %2127 = vmatpush1.msra.mxu0 0.0
        %2128 = vmatprep.subr.mxu0 0.0
        %2129 = vmatpush1.msra.mxu0 0.0
        %2130 = vmatprep.subr.mxu0 0.0
        %2131 = vmatpush1.msra.mxu0 0.0
        %2132 = vmatprep.subr.mxu0 0.0
        %2133 = vmatpush1.msra.mxu0 0.0
        %2134 = vmatprep.subr.mxu0 0.0
        %2135 = vmatpush1.msra.mxu0 0.0
        %2136 = vmatprep.subr.mxu0 0.0
        %2137 = vmatpush1.msra.mxu0 0.0
        %2138 = vmatprep.subr.mxu0 0.0
        %2139 = vmatpush1.msra.mxu0 0.0
        %2140 = vmatprep.subr.mxu0 0.0
        %2141 = vmatpush1.msra.mxu0 0.0
        %2142 = vmatprep.subr.mxu0 0.0
        %2143 = vmatpush1.msra.mxu0 0.0
        %2144 = vmatprep.subr.mxu0 0.0
        %2145 = vmatpush1.msra.mxu0 0.0
        %2146 = vmatprep.subr.mxu0 0.0
        %2147 = vmatpush1.msra.mxu0 0.0
        %2148 = vmatprep.subr.mxu0 0.0
        %2149 = vmatpush1.msra.mxu0 0.0
        %2150 = vmatprep.subr.mxu0 0.0
        %2151 = vmatpush1.msra.mxu0 0.0
        %2152 = vmatprep.subr.mxu0 0.0
        %2153 = vmatpush1.msra.mxu0 0.0
        %2154 = vmatprep.subr.mxu0 0.0
        %2155 = vmatpush1.msra.mxu0 0.0
        %2156 = vmatprep.subr.mxu0 0.0
        %2157 = vmatpush1.msra.mxu0 0.0
        %2158 = vmatprep.subr.mxu0 0.0
        %2159 = vmatpush1.msra.mxu0 0.0
        %2160 = vmatprep.subr.mxu0 0.0
        %2161 = vmatpush1.msra.mxu0 0.0
        %2162 = vmatprep.subr.mxu0 0.0
        %2163 = vmatpush1.msra.mxu0 0.0
        %2164 = vmatprep.subr.mxu0 0.0
        %2165 = vmatpush1.msra.mxu0 0.0
        %2166 = vmatprep.subr.mxu0 0.0
        %2167 = vmatpush1.msra.mxu0 0.0
        %2168 = vmatprep.subr.mxu0 0.0
        %2169 = vmatpush1.msra.mxu0 0.0
        %2170 = vmatprep.subr.mxu0 0.0
        %2171 = vmatpush1.msra.mxu0 0.0
        %2172 = vmatprep.subr.mxu0 0.0
        %2173 = vmatpush1.msra.mxu0 0.0
        %2174 = vmatprep.subr.mxu0 0.0
        %2175 = vmatpush1.msra.mxu0 0.0
        %2176 = vmatprep.subr.mxu0 0.0
        %2177 = vmatpush1.msra.mxu0 0.0
        %2178 = vmatprep.mubr.f32.mxu0 0.0
        %2179 = vmatmul.mubr.f32.gmra.mrb[0].mxu0 %v2112
        %v2180 = vpop.f32.mrb[0].mxu0
        %v2181 = vadd.f32 %v2110, %v2180
        %v2182 = vpop.f32.mrb[0].mxu0
        %2183 = vdwg.mxu0
        %2184 = vst [vmem:[%s270] sm:$0x1] %v2181
        %s2185 = sand.u32 %s181, 1
        %s2186 = scalar_lea.sflag [#allocation3], %s2185
        %s2187 = sand.u32 %s181, 1
        %s2188 = scalar_lea.vmem [#allocation2], %s2187
        // Predicated region
        $region49: #{tpu_custom_call.1} parent=47 // pred_check
          %p2189 = pneg %p191
        $region50: #{tpu_custom_call.1} parent=47 // pred_check_branch
          %2191 = sbr.rel (%p2189) target = $region52
        $region51: #{tpu_custom_call.1} parent=47 // pred_region
          %s2193 = ssub.s32 16, 16
          %2194 = vsyncadd %s2186, %s2193
          %s2195 = smul.addr %s21, 16
          %s2196 = scalar_lea.hbm %s7, %s2195
          %s2198 = sshll.u32 %s2188, 4
          %s2199 = int_to_ptr.vmem [resolvable:$true] %s2198
          %2201 = dma.vmem_to_hbm [thread:$0]  %s2199, 16, %s2196, %s2186
        $region52: #{tpu_custom_call.1} parent=47 // pred_fallthru
          _
      $region48: #{tpu_custom_call.1} parent=5 // pred_fallthru
        _
      %p2202 = scmp.le.s32.totalorder 2, %s16
      // Predicated region
      $region53: #{tpu_custom_call.1} parent=5 // pred_check
        %p2203 = pneg %p2202
      $region54: #{tpu_custom_call.1} parent=5 // pred_check_branch
        %2205 = sbr.rel (%p2203) target = $region56
      $region55: #{tpu_custom_call.1} parent=5 // pred_region
        %s2206 = ssub.s32 %s16, 2
        // Predicated region
        $region57: #{tpu_custom_call.1} parent=55 // pred_check
          %p2207 = pneg %p197
        $region58: #{tpu_custom_call.1} parent=55 // pred_check_branch
          %2209 = sbr.rel (%p2207) target = $region60
        $region59: #{tpu_custom_call.1} parent=55 // pred_region
          %s2210 = sand.u32 %s182, 1
          %s2211 = scalar_lea.sflag [#allocation3], %s2210
          %s2212 = sand.u32 %s182, 1
          %s2213 = scalar_lea.vmem [#allocation2], %s2212
          %2214 = dma.done %s2211, 16
        $region60: #{tpu_custom_call.1} parent=55 // pred_fallthru
          _
      $region56: #{tpu_custom_call.1} parent=5 // pred_fallthru
        _
    $region6: #{tpu_custom_call.1} parent=1 // loop_footer
      %s20 = sadd.s32 1, %s16
    $region7: #{tpu_custom_call.1} parent=1 // loop_footer_branch
      %15 = sbr.rel target = $region3
    $region8: #{tpu_custom_call.1} parent=1 // loop_exit
      _
    %2215 = vsyncpa [#allocation3], 1
    %s2216 = scalar_lea.sflag [#allocation3], 1
    %2217 = vsyncpa %s2216, 1

</llo_original>
